<compile_context>
chip_gen: v6e
topology: v6e:2x2x1
jax: 0.10.0
libtpu: 0.0.40
codegen_flags: <defaults>
</compile_context>

<pallas_src>
import numpy as np
import jax
import jax.numpy as jnp
from jax import lax
from jax.experimental import pallas as pl
from jax.experimental.pallas import tpu as pltpu

EPS = 1e-5


def _bn_normalize(y, gamma, beta):
    """Training-mode BatchNorm on a channel tile.

    y:     (N, Ct, P) float32   (P = Ho*Wo spatial positions)
    gamma: (1, Ct, 1) float32
    beta:  (1, Ct, 1) float32
    Per-channel biased batch stats over (N, P); centered two-pass variance.
    """
    n, _, p = y.shape
    inv_count = 1.0 / float(n * p)
    mean = jnp.sum(jnp.sum(y, axis=2, keepdims=True), axis=0, keepdims=True) * inv_count
    d = y - mean
    var = jnp.sum(jnp.sum(d * d, axis=2, keepdims=True), axis=0, keepdims=True) * inv_count
    a = gamma * lax.rsqrt(var + EPS)            # per-channel scale
    return d * a + beta                         # 1 mul + 1 add per element


def fused_kernel(pool_ref, x1_ref, x2_ref, gamma_ref, beta_ref, out_ref):
    # pool_ref : (HWin, P)      bf16  0.25/0 avg-pool selection matrix (resident)
    # x1_ref   : (N, Ct, HWin)  f32   channel tile of the pool input (NCHW, flat spatial)
    #                                 (rows past C1 in the last tile are undefined padding)
    # x2_ref   : (N, C2, P)     f32   passthrough group (resident; used on last tile only)
    # gamma_ref: (Ct, 1), beta_ref: (Ct, 1)  affine params for this tile's channels
    # out_ref  : (N, Ct, P)
    n, ct, hwin = x1_ref.shape
    p = pool_ref.shape[1]
    c2 = x2_ref.shape[1]

    # ---- pooled group: 2x2 average pool as an MXU selection matmul ----------
    x = x1_ref[...].astype(jnp.float32).reshape(n * ct, hwin)
    x_hi = x.astype(jnp.bfloat16)                                 # top ~8 mantissa bits
    x_lo = (x - x_hi.astype(jnp.float32)).astype(jnp.bfloat16)    # next ~8 bits
    m = pool_ref[...]                                             # bf16, entries exact
    pooled = (jnp.dot(x_hi, m, preferred_element_type=jnp.float32)
              + jnp.dot(x_lo, m, preferred_element_type=jnp.float32))
    y = pooled.reshape(n, ct, p)

    gamma = gamma_ref[...].astype(jnp.float32)[None]              # (1, Ct, 1)
    beta = beta_ref[...].astype(jnp.float32)[None]
    out_ref[...] = _bn_normalize(y, gamma, beta).astype(out_ref.dtype)

    # ---- passthrough group: overwrite the last C2 rows of the LAST tile -----
    @pl.when(pl.program_id(0) == pl.num_programs(0) - 1)
    def _():
        y2 = x2_ref[...].astype(jnp.float32)                      # (N, C2, P)
        g2 = gamma_ref[ct - c2:, :].astype(jnp.float32)[None]
        b2 = beta_ref[ct - c2:, :].astype(jnp.float32)[None]
        out_ref[:, ct - c2:, :] = _bn_normalize(y2, g2, b2).astype(out_ref.dtype)


def _pool_matrix_np(H, W, Ho, Wo):
    """(H*W, Ho*Wo) matrix with 0.25 where input pixel q feeds output pixel p."""
    q = np.arange(H * W)
    hi, wi = q // W, q % W
    pidx = np.arange(Ho * Wo)
    ho, wo = pidx // Wo, pidx % Wo
    sel = (hi[:, None] // 2 == ho[None, :]) & (wi[:, None] // 2 == wo[None, :])
    return sel.astype(np.float32) * 0.25        # exactly representable in bf16


def avgpool_cat_batchnorm(x368, x376, gamma, beta):
    """x368: (N, C1, H, W) NCHW; x376: (N, C2, H//2, W//2) NCHW.
    Returns (N, C1+C2, H//2, W//2) NCHW, matching the PyTorch module forward."""
    N, C1, H, W = x368.shape
    Ho, Wo = H // 2, W // 2
    _, C2, _, _ = x376.shape
    C = C1 + C2
    HWin, P = H * W, Ho * Wo
    assert H % 2 == 0 and W % 2 == 0
    assert C1 % 8 == 0 and C2 % 8 == 0

    # Tile the *concatenated* channel axis.  Prefer exactly 2 tiles (even split
    # across the two v7x TensorCores, fewer grid steps); fall back to 1 tile.
    half = C // 2
    if C % 2 == 0 and half % 8 == 0 and C2 <= half and C1 > half:
        n_tiles, ct = 2, half
    else:
        n_tiles, ct = 1, C

    # Zero-copy channel-major views (contiguous reshapes of NCHW).
    x1 = x368.reshape(N, C1, HWin)
    x2 = x376.reshape(N, C2, P)
    g = gamma.reshape(C, 1).astype(jnp.float32)
    b = beta.reshape(C, 1).astype(jnp.float32)
    pool_mat = jnp.asarray(_pool_matrix_np(H, W, Ho, Wo), dtype=jnp.bfloat16)

    itemsize = jnp.dtype(x368.dtype).itemsize
    cost = pl.CostEstimate(
        flops=4 * N * C * HWin * P + 10 * N * C * P,
        transcendentals=C,
        bytes_accessed=(N * C1 * HWin + N * C2 * P + N * C * P) * itemsize
                       + HWin * P * 2 + 2 * C * 4,
    )

    out = pl.pallas_call(
        fused_kernel,
        out_shape=jax.ShapeDtypeStruct((N, C, P), x368.dtype),
        grid_spec=pltpu.PrefetchScalarGridSpec(
            num_scalar_prefetch=0,
            grid=(n_tiles,),
            in_specs=[
                pl.BlockSpec((HWin, P), lambda i: (0, 0)),          # pool matrix (resident)
                pl.BlockSpec((N, ct, HWin), lambda i: (0, i, 0)),   # x1 channel tile
                pl.BlockSpec((N, C2, P), lambda i: (0, 0, 0)),      # passthrough (resident)
                pl.BlockSpec((ct, 1), lambda i: (i, 0)),            # gamma tile
                pl.BlockSpec((ct, 1), lambda i: (i, 0)),            # beta tile
            ],
            out_specs=pl.BlockSpec((N, ct, P), lambda i: (0, i, 0)),
        ),
        compiler_params=pltpu.CompilerParams(
            dimension_semantics=("parallel",),   # disjoint output tiles, per-channel stats
            vmem_limit_bytes=32 * 1024 * 1024,
        ),
        cost_estimate=cost,
    )(pool_mat, x1, x2, g, b)

    return out.reshape(N, C, Ho, Wo)


def reference(x368, x376, gamma, beta):
    """Pure-JAX reference of the PyTorch forward (training-mode BN)."""
    N, C1, H, W = x368.shape
    pooled = x368.reshape(N, C1, H // 2, 2, W // 2, 2).mean(axis=(3, 5))
    y = jnp.concatenate([pooled, x376], axis=1)
    mean = y.mean(axis=(0, 2, 3), keepdims=True)
    var = y.var(axis=(0, 2, 3), keepdims=True)   # biased, as BN uses for normalization
    yhat = (y - mean) / jnp.sqrt(var + EPS)
    return yhat * gamma[None, :, None, None] + beta[None, :, None, None]


if __name__ == "__main__":
    key = jax.random.PRNGKey(0)
    k1, k2, k3, k4 = jax.random.split(key, 4)

    # Shapes from the module spec.
    N, C1, C2, H, W = 1, 640, 32, 14, 14
    x368 = jax.random.normal(k1, (N, C1, H, W), dtype=jnp.float32)
    x376 = jax.random.normal(k2, (N, C2, H // 2, W // 2), dtype=jnp.float32)

    C = C1 + C2
    gamma = jax.random.normal(k3, (C,), dtype=jnp.float32)
    beta = jax.random.normal(k4, (C,), dtype=jnp.float32)

    fused = jax.jit(avgpool_cat_batchnorm)
    out = jax.block_until_ready(fused(x368, x376, gamma, beta))

    ref = reference(x368, x376, gamma, beta)
    assert out.shape == (N, C, H // 2, W // 2)
    assert jnp.allclose(out, ref, atol=1e-4, rtol=1e-4), "mismatch vs reference"

    # TODO(synk): BatchNorm running_mean/running_var momentum updates are
    # training-time buffer side effects that do not affect this forward output.
    print("KERNEL_OK")
</pallas_src>

<mosaic_0001>
module attributes {stable_mosaic.version = 11 : i64} {
  func.func @fused_kernel(%arg0: i32, %arg1: memref<196x49xbf16, #tpu.memory_space<vmem>>, %arg2: memref<1x336x196xf32, #tpu.memory_space<vmem>>, %arg3: memref<1x32x49xf32, #tpu.memory_space<vmem>>, %arg4: memref<336x1xf32, #tpu.memory_space<vmem>>, %arg5: memref<336x1xf32, #tpu.memory_space<vmem>>, %arg6: memref<1x336x49xf32, #tpu.memory_space<vmem>>) attributes {dimension_semantics = [#tpu.dimension_semantics<parallel>], iteration_bounds = array<i64: 2>, scalar_prefetch = 0 : i64, scratch_operands = 0 : i64, tpu.core_type = #tpu.core_type<tc>, window_params = [{pipeline_mode = #tpu.pipeline_mode<synchronous>, transform_indices = @transform_0, window_bounds = array<i64: 196, 49>}, {transform_indices = @transform_1, window_bounds = array<i64: 1, 336, 196>}, {pipeline_mode = #tpu.pipeline_mode<synchronous>, transform_indices = @transform_2, window_bounds = array<i64: 1, 32, 49>}, {transform_indices = @transform_3, window_bounds = array<i64: 336, 1>}, {transform_indices = @transform_4, window_bounds = array<i64: 336, 1>}, {transform_indices = @transform_5, window_bounds = array<i64: 1, 336, 49>}]} {
    %c0 = arith.constant 0 : index
    %c0_0 = arith.constant 0 : index
    %c0_1 = arith.constant 0 : index
    %0 = vector.load %arg2[%c0, %c0_0, %c0_1] : memref<1x336x196xf32, #tpu.memory_space<vmem>>, vector<1x336x196xf32>
    %1 = vector.shape_cast %0 : vector<1x336x196xf32> to vector<336x196xf32>
    %2 = arith.truncf %1 : vector<336x196xf32> to vector<336x196xbf16>
    %3 = arith.extf %2 : vector<336x196xbf16> to vector<336x196xf32>
    %4 = arith.subf %1, %3 : vector<336x196xf32>
    %5 = arith.truncf %4 : vector<336x196xf32> to vector<336x196xbf16>
    %c0_2 = arith.constant 0 : index
    %c0_3 = arith.constant 0 : index
    %6 = vector.load %arg1[%c0_2, %c0_3] : memref<196x49xbf16, #tpu.memory_space<vmem>>, vector<196x49xbf16>
    %cst = arith.constant dense<0.000000e+00> : vector<336x49xf32>
    %7 = tpu.matmul %2, %6, %cst {dimension_numbers = #tpu.dot_dimension_numbers<[1], [0], [0], [1], [0, 0, 1, 1], [], []>} : vector<336x196xbf16>, vector<196x49xbf16>, vector<336x49xf32> -> vector<336x49xf32>
    %cst_4 = arith.constant dense<0.000000e+00> : vector<336x49xf32>
    %8 = tpu.matmul %5, %6, %cst_4 {dimension_numbers = #tpu.dot_dimension_numbers<[1], [0], [0], [1], [0, 0, 1, 1], [], []>} : vector<336x196xbf16>, vector<196x49xbf16>, vector<336x49xf32> -> vector<336x49xf32>
    %9 = arith.addf %7, %8 : vector<336x49xf32>
    %10 = vector.shape_cast %9 : vector<336x49xf32> to vector<1x336x49xf32>
    %c0_5 = arith.constant 0 : index
    %c0_6 = arith.constant 0 : index
    %11 = vector.load %arg4[%c0_5, %c0_6] : memref<336x1xf32, #tpu.memory_space<vmem>>, vector<336x1xf32>
    %12 = vector.shape_cast %11 : vector<336x1xf32> to vector<1x336x1xf32>
    %c0_7 = arith.constant 0 : index
    %c0_8 = arith.constant 0 : index
    %13 = vector.load %arg5[%c0_7, %c0_8] : memref<336x1xf32, #tpu.memory_space<vmem>>, vector<336x1xf32>
    %14 = vector.shape_cast %13 : vector<336x1xf32> to vector<1x336x1xf32>
    %cst_9 = arith.constant dense<0.000000e+00> : vector<1x336xf32>
    %15 = vector.multi_reduction <add>, %10, %cst_9 [2] : vector<1x336x49xf32> to vector<1x336xf32>
    %16 = vector.shape_cast %15 : vector<1x336xf32> to vector<1x336x1xf32>
    %cst_10 = arith.constant dense<0.000000e+00> : vector<336x1xf32>
    %17 = vector.multi_reduction <add>, %16, %cst_10 [0] : vector<1x336x1xf32> to vector<336x1xf32>
    %18 = vector.shape_cast %17 : vector<336x1xf32> to vector<1x336x1xf32>
    %cst_11 = arith.constant 0.0204081628 : f32
    %19 = vector.broadcast %cst_11 : f32 to vector<1x336x1xf32>
    %20 = arith.mulf %18, %19 : vector<1x336x1xf32>
    %21 = vector.broadcast %20 : vector<1x336x1xf32> to vector<1x336x49xf32>
    %22 = arith.subf %10, %21 : vector<1x336x49xf32>
    %23 = arith.mulf %22, %22 : vector<1x336x49xf32>
    %cst_12 = arith.constant dense<0.000000e+00> : vector<1x336xf32>
    %24 = vector.multi_reduction <add>, %23, %cst_12 [2] : vector<1x336x49xf32> to vector<1x336xf32>
    %25 = vector.shape_cast %24 : vector<1x336xf32> to vector<1x336x1xf32>
    %cst_13 = arith.constant dense<0.000000e+00> : vector<336x1xf32>
    %26 = vector.multi_reduction <add>, %25, %cst_13 [0] : vector<1x336x1xf32> to vector<336x1xf32>
    %27 = vector.shape_cast %26 : vector<336x1xf32> to vector<1x336x1xf32>
    %cst_14 = arith.constant 0.0204081628 : f32
    %28 = vector.broadcast %cst_14 : f32 to vector<1x336x1xf32>
    %29 = arith.mulf %27, %28 : vector<1x336x1xf32>
    %cst_15 = arith.constant 9.99999974E-6 : f32
    %30 = vector.broadcast %cst_15 : f32 to vector<1x336x1xf32>
    %31 = arith.addf %29, %30 : vector<1x336x1xf32>
    %32 = math.rsqrt %31 : vector<1x336x1xf32>
    %33 = arith.mulf %12, %32 : vector<1x336x1xf32>
    %34 = vector.broadcast %33 : vector<1x336x1xf32> to vector<1x336x49xf32>
    %35 = arith.mulf %22, %34 : vector<1x336x49xf32>
    %36 = vector.broadcast %14 : vector<1x336x1xf32> to vector<1x336x49xf32>
    %37 = arith.addf %35, %36 : vector<1x336x49xf32>
    %c0_16 = arith.constant 0 : index
    %c0_17 = arith.constant 0 : index
    %c0_18 = arith.constant 0 : index
    %38 = vector.load %arg6[%c0_16, %c0_17, %c0_18] : memref<1x336x49xf32, #tpu.memory_space<vmem>>, vector<1x336x49xf32>
    tpu.vector_store %arg6[%c0_16, %c0_17, %c0_18], %37 {strides = array<i32>} : memref<1x336x49xf32, #tpu.memory_space<vmem>>, vector<1x336x49xf32>,
    %c1_i32 = arith.constant 1 : i32
    %39 = arith.cmpi eq, %arg0, %c1_i32 : i32
    %40 = arith.extui %39 : i1 to i32
    %c0_i32 = arith.constant 0 : i32
    %41 = arith.cmpi ne, %40, %c0_i32 : i32
    scf.if %41 {
      %c0_19 = arith.constant 0 : index
      %c0_20 = arith.constant 0 : index
      %c0_21 = arith.constant 0 : index
      %42 = vector.load %arg3[%c0_19, %c0_20, %c0_21] : memref<1x32x49xf32, #tpu.memory_space<vmem>>, vector<1x32x49xf32>
      %c304 = arith.constant 304 : index
      %c0_22 = arith.constant 0 : index
      %43 = vector.load %arg4[%c304, %c0_22] : memref<336x1xf32, #tpu.memory_space<vmem>>, vector<32x1xf32>
      %44 = vector.shape_cast %43 : vector<32x1xf32> to vector<1x32x1xf32>
      %c304_23 = arith.constant 304 : index
      %c0_24 = arith.constant 0 : index
      %45 = vector.load %arg5[%c304_23, %c0_24] : memref<336x1xf32, #tpu.memory_space<vmem>>, vector<32x1xf32>
      %46 = vector.shape_cast %45 : vector<32x1xf32> to vector<1x32x1xf32>
      %cst_25 = arith.constant dense<0.000000e+00> : vector<1x32xf32>
      %47 = vector.multi_reduction <add>, %42, %cst_25 [2] : vector<1x32x49xf32> to vector<1x32xf32>
      %48 = vector.shape_cast %47 : vector<1x32xf32> to vector<1x32x1xf32>
      %cst_26 = arith.constant dense<0.000000e+00> : vector<32x1xf32>
      %49 = vector.multi_reduction <add>, %48, %cst_26 [0] : vector<1x32x1xf32> to vector<32x1xf32>
      %50 = vector.shape_cast %49 : vector<32x1xf32> to vector<1x32x1xf32>
      %cst_27 = arith.constant 0.0204081628 : f32
      %51 = vector.broadcast %cst_27 : f32 to vector<1x32x1xf32>
      %52 = arith.mulf %50, %51 : vector<1x32x1xf32>
      %53 = vector.broadcast %52 : vector<1x32x1xf32> to vector<1x32x49xf32>
      %54 = arith.subf %42, %53 : vector<1x32x49xf32>
      %55 = arith.mulf %54, %54 : vector<1x32x49xf32>
      %cst_28 = arith.constant dense<0.000000e+00> : vector<1x32xf32>
      %56 = vector.multi_reduction <add>, %55, %cst_28 [2] : vector<1x32x49xf32> to vector<1x32xf32>
      %57 = vector.shape_cast %56 : vector<1x32xf32> to vector<1x32x1xf32>
      %cst_29 = arith.constant dense<0.000000e+00> : vector<32x1xf32>
      %58 = vector.multi_reduction <add>, %57, %cst_29 [0] : vector<1x32x1xf32> to vector<32x1xf32>
      %59 = vector.shape_cast %58 : vector<32x1xf32> to vector<1x32x1xf32>
      %cst_30 = arith.constant 0.0204081628 : f32
      %60 = vector.broadcast %cst_30 : f32 to vector<1x32x1xf32>
      %61 = arith.mulf %59, %60 : vector<1x32x1xf32>
      %cst_31 = arith.constant 9.99999974E-6 : f32
      %62 = vector.broadcast %cst_31 : f32 to vector<1x32x1xf32>
      %63 = arith.addf %61, %62 : vector<1x32x1xf32>
      %64 = math.rsqrt %63 : vector<1x32x1xf32>
      %65 = arith.mulf %44, %64 : vector<1x32x1xf32>
      %66 = vector.broadcast %65 : vector<1x32x1xf32> to vector<1x32x49xf32>
      %67 = arith.mulf %54, %66 : vector<1x32x49xf32>
      %68 = vector.broadcast %46 : vector<1x32x1xf32> to vector<1x32x49xf32>
      %69 = arith.addf %67, %68 : vector<1x32x49xf32>
      %c0_32 = arith.constant 0 : index
      %c304_33 = arith.constant 304 : index
      %c0_34 = arith.constant 0 : index
      %70 = vector.load %arg6[%c0_32, %c304_33, %c0_34] : memref<1x336x49xf32, #tpu.memory_space<vmem>>, vector<1x32x49xf32>
      tpu.vector_store %arg6[%c0_32, %c304_33, %c0_34], %69 {strides = array<i32>} : memref<1x336x49xf32, #tpu.memory_space<vmem>>, vector<1x32x49xf32>,
    } else {
    }
    return
  }
  func.func @transform_0(%arg0: i32) -> (i32, i32) {
    %c0_i32 = arith.constant 0 : i32
    %c0_i32_0 = arith.constant 0 : i32
    %c0_i32_1 = arith.constant 0 : i32
    return %c0_i32, %c0_i32_0 : i32, i32
  }
  func.func @transform_1(%arg0: i32) -> (i32, i32, i32) {
    %c0_i32 = arith.constant 0 : i32
    %c0_i32_0 = arith.constant 0 : i32
    %c0_i32_1 = arith.constant 0 : i32
    return %c0_i32, %arg0, %c0_i32_0 : i32, i32, i32
  }
  func.func @transform_2(%arg0: i32) -> (i32, i32, i32) {
    %c0_i32 = arith.constant 0 : i32
    %c0_i32_0 = arith.constant 0 : i32
    %c0_i32_1 = arith.constant 0 : i32
    %c0_i32_2 = arith.constant 0 : i32
    return %c0_i32, %c0_i32_0, %c0_i32_1 : i32, i32, i32
  }
  func.func @transform_3(%arg0: i32) -> (i32, i32) {
    %c0_i32 = arith.constant 0 : i32
    %c0_i32_0 = arith.constant 0 : i32
    return %arg0, %c0_i32 : i32, i32
  }
  func.func @transform_4(%arg0: i32) -> (i32, i32) {
    %c0_i32 = arith.constant 0 : i32
    %c0_i32_0 = arith.constant 0 : i32
    return %arg0, %c0_i32 : i32, i32
  }
  func.func @transform_5(%arg0: i32) -> (i32, i32, i32) {
    %c0_i32 = arith.constant 0 : i32
    %c0_i32_0 = arith.constant 0 : i32
    %c0_i32_1 = arith.constant 0 : i32
    return %c0_i32, %arg0, %c0_i32_0 : i32, i32, i32
  }
}

</mosaic_0001>

<llo_original>
// kernel: avgpool_cat_batchnorm.1
$region0: #{avgpool_cat_batchnorm.1}
  #allocation0 [shape = 'u32[]', space=smem, size = 0x4, offset = 0x4, fixed_abs, tag = 'smem constant byte address 0x4 - core index']
  #allocation1 [shape = 'u32[144,128]{1,0:T(1,128)}', space=vmem, size = 0x12000, scoped, tag = 'internal scratch']
  %s0 = inlined_call_operand.vmem [shape: bf16[196,49], index: 0, kind: input, shape index: {}]
  %s1 = inlined_call_operand.vmem [shape: f32[1,640,196], index: 1, kind: input, shape index: {}]
  %s2 = inlined_call_operand.vmem [shape: f32[1,32,49], index: 2, kind: input, shape index: {}]
  %s3 = inlined_call_operand.vmem [shape: f32[672,1], index: 3, kind: input, shape index: {}]
  %s4 = inlined_call_operand.vmem [shape: f32[672,1], index: 4, kind: input, shape index: {}]
  %s5 = inlined_call_operand.vmem [shape: f32[1,672,49], index: 5, kind: output, shape index: {}]
  %s6 = sld [smem:[#allocation0]]
  $region57: #{avgpool_cat_batchnorm.1} parent=0
    _
  %s8 = ssub.s32 1, %s6
  %s9 = scalar_select 0, %s8, %s6
  loop: start=0, step=1, limit=4
  $region2: #{avgpool_cat_batchnorm.1} parent=0 // loop_pre_header
    _
  $region3: #{avgpool_cat_batchnorm.1} parent=0 // loop_header
    %s11 = sphi 0, %s15
    %p12 = scmp.ge.s32.totalorder %s11, 4
    %s19 = sphi 0, %s19
    %s21 = sphi 0, %s19
    %s22 = sphi 0, %s21
    %s36 = sphi 0, %s22
    %s42 = sphi 0, %s44
    %s45 = sphi 0, %s42
    %s46 = sphi 0, %s45
    %s62 = sphi 0, %s46
    %s66 = sphi 0, %s66
    %s68 = sphi 0, %s66
    %s69 = sphi 0, %s68
    %s83 = sphi 0, %s69
    %s89 = sphi 0, %s91
    %s92 = sphi 0, %s89
    %s93 = sphi 0, %s92
    %s109 = sphi 0, %s93
    %s115 = sphi 0, %s117
    %s118 = sphi 0, %s115
    %s119 = sphi 0, %s118
    %s135 = sphi 0, %s119
    %s141 = sphi 0, %s143
    %s144 = sphi 0, %s141
    %s145 = sphi 0, %s144
    %s161 = sphi 0, %s145
  $region4: #{avgpool_cat_batchnorm.1} parent=0 // loop_header_branch
    %14 = sbr.rel (%p12) target = $region8
  $region5: #{avgpool_cat_batchnorm.1} parent=0 // loop_body
    %s16 = ssub.s32 %s11, 1
    %s17 = ssub.s32 %s11, 2
    %s18 = sadd.s32 %s11, 1
    %s20 = sadd.s32 %s19, 1
    %p23 = scmp.eq.s32.totalorder %s11, 1
    %p24 = scmp.ne.s32.totalorder %s19, %s21
    %p25 = scmp.eq.s32.totalorder %s11, 0
    %p26 = por %p24, %p25
    %p27 = scmp.ne.s32.totalorder %s19, %s21
    %p28 = scmp.eq.s32.totalorder %s16, 1
    %p29 = por %p27, %p28
    %p30 = scmp.ne.s32.totalorder %s21, %s22
    %p31 = scmp.eq.s32.totalorder %s16, 0
    %p32 = por %p30, %p31
    %p33 = scmp.ne.s32.totalorder %s21, %s22
    %p34 = scmp.eq.s32.totalorder %s17, 1
    %p35 = por %p33, %p34
    %p37 = scmp.ne.s32.totalorder %s22, %s36
    %p38 = scmp.eq.s32.totalorder %s17, 0
    %p39 = por %p37, %p38
    %s40 = ssub.s32 %s11, %s18
    %p41 = scmp.eq.s32.totalorder %s40, 0
    %s43 = sadd.s32 %s42, 1
    %s44 = scalar_select %p41, %s42, %s43
    %p47 = pneg %p41
    %p48 = scmp.eq.s32.totalorder %s11, 1
    %p49 = por %p47, %p48
    %p50 = scmp.ne.s32.totalorder %s42, %s45
    %p51 = scmp.eq.s32.totalorder %s11, 0
    %p52 = por %p50, %p51
    %p53 = scmp.ne.s32.totalorder %s42, %s45
    %p54 = scmp.eq.s32.totalorder %s16, 1
    %p55 = por %p53, %p54
    %p56 = scmp.ne.s32.totalorder %s45, %s46
    %p57 = scmp.eq.s32.totalorder %s16, 0
    %p58 = por %p56, %p57
    %p59 = scmp.ne.s32.totalorder %s45, %s46
    %p60 = scmp.eq.s32.totalorder %s17, 1
    %p61 = por %p59, %p60
    %p63 = scmp.ne.s32.totalorder %s46, %s62
    %p64 = scmp.eq.s32.totalorder %s17, 0
    %p65 = por %p63, %p64
    %s67 = sadd.s32 %s66, 1
    %p70 = scmp.eq.s32.totalorder %s11, 1
    %p71 = scmp.ne.s32.totalorder %s66, %s68
    %p72 = scmp.eq.s32.totalorder %s11, 0
    %p73 = por %p71, %p72
    %p74 = scmp.ne.s32.totalorder %s66, %s68
    %p75 = scmp.eq.s32.totalorder %s16, 1
    %p76 = por %p74, %p75
    %p77 = scmp.ne.s32.totalorder %s68, %s69
    %p78 = scmp.eq.s32.totalorder %s16, 0
    %p79 = por %p77, %p78
    %p80 = scmp.ne.s32.totalorder %s68, %s69
    %p81 = scmp.eq.s32.totalorder %s17, 1
    %p82 = por %p80, %p81
    %p84 = scmp.ne.s32.totalorder %s69, %s83
    %p85 = scmp.eq.s32.totalorder %s17, 0
    %p86 = por %p84, %p85
    %s87 = ssub.s32 %s11, %s18
    %p88 = scmp.eq.s32.totalorder %s87, 0
    %s90 = sadd.s32 %s89, 1
    %s91 = scalar_select %p88, %s89, %s90
    %p94 = pneg %p88
    %p95 = scmp.eq.s32.totalorder %s11, 1
    %p96 = por %p94, %p95
    %p97 = scmp.ne.s32.totalorder %s89, %s92
    %p98 = scmp.eq.s32.totalorder %s11, 0
    %p99 = por %p97, %p98
    %p100 = scmp.ne.s32.totalorder %s89, %s92
    %p101 = scmp.eq.s32.totalorder %s16, 1
    %p102 = por %p100, %p101
    %p103 = scmp.ne.s32.totalorder %s92, %s93
    %p104 = scmp.eq.s32.totalorder %s16, 0
    %p105 = por %p103, %p104
    %p106 = scmp.ne.s32.totalorder %s92, %s93
    %p107 = scmp.eq.s32.totalorder %s17, 1
    %p108 = por %p106, %p107
    %p110 = scmp.ne.s32.totalorder %s93, %s109
    %p111 = scmp.eq.s32.totalorder %s17, 0
    %p112 = por %p110, %p111
    %s113 = ssub.s32 %s11, %s18
    %p114 = scmp.eq.s32.totalorder %s113, 0
    %s116 = sadd.s32 %s115, 1
    %s117 = scalar_select %p114, %s115, %s116
    %p120 = pneg %p114
    %p121 = scmp.eq.s32.totalorder %s11, 1
    %p122 = por %p120, %p121
    %p123 = scmp.ne.s32.totalorder %s115, %s118
    %p124 = scmp.eq.s32.totalorder %s11, 0
    %p125 = por %p123, %p124
    %p126 = scmp.ne.s32.totalorder %s115, %s118
    %p127 = scmp.eq.s32.totalorder %s16, 1
    %p128 = por %p126, %p127
    %p129 = scmp.ne.s32.totalorder %s118, %s119
    %p130 = scmp.eq.s32.totalorder %s16, 0
    %p131 = por %p129, %p130
    %p132 = scmp.ne.s32.totalorder %s118, %s119
    %p133 = scmp.eq.s32.totalorder %s17, 1
    %p134 = por %p132, %p133
    %p136 = scmp.ne.s32.totalorder %s119, %s135
    %p137 = scmp.eq.s32.totalorder %s17, 0
    %p138 = por %p136, %p137
    %s139 = ssub.s32 %s11, %s18
    %p140 = scmp.eq.s32.totalorder %s139, 0
    %s142 = sadd.s32 %s141, 1
    %s143 = scalar_select %p140, %s141, %s142
    %p146 = pneg %p140
    %p147 = scmp.eq.s32.totalorder %s11, 1
    %p148 = por %p146, %p147
    %p149 = scmp.ne.s32.totalorder %s141, %s144
    %p150 = scmp.eq.s32.totalorder %s11, 0
    %p151 = por %p149, %p150
    %p152 = scmp.ne.s32.totalorder %s141, %s144
    %p153 = scmp.eq.s32.totalorder %s16, 1
    %p154 = por %p152, %p153
    %p155 = scmp.ne.s32.totalorder %s144, %s145
    %p156 = scmp.eq.s32.totalorder %s16, 0
    %p157 = por %p155, %p156
    %p158 = scmp.ne.s32.totalorder %s144, %s145
    %p159 = scmp.eq.s32.totalorder %s17, 1
    %p160 = por %p158, %p159
    %p162 = scmp.ne.s32.totalorder %s145, %s161
    %p163 = scmp.eq.s32.totalorder %s17, 0
    %p164 = por %p162, %p163
    %p165 = scmp.le.s32.totalorder 1, %s11
    %p166 = scmp.lt.s32.totalorder %s11, 3
    %p167 = pnand %p165, %p166
    %p168 = pneg %p167
    // Predicated region
    $region9: #{avgpool_cat_batchnorm.1} parent=5 // pred_check
      _
    $region10: #{avgpool_cat_batchnorm.1} parent=5 // pred_check_branch
      %170 = sbr.rel (%p167) target = $region12
    $region11: #{avgpool_cat_batchnorm.1} parent=5 // pred_region
      %s171 = ssub.s32 %s11, 1
      // Predicated region
      $region13: #{avgpool_cat_batchnorm.1} parent=11 // pred_check
        %p172 = pneg %p32
      $region14: #{avgpool_cat_batchnorm.1} parent=11 // pred_check_branch
        %174 = sbr.rel (%p172) target = $region16
      $region15: #{avgpool_cat_batchnorm.1} parent=11 // pred_region
        _
      $region16: #{avgpool_cat_batchnorm.1} parent=11 // pred_fallthru
        _
      // Predicated region
      $region17: #{avgpool_cat_batchnorm.1} parent=11 // pred_check
        %p175 = pneg %p79
      $region18: #{avgpool_cat_batchnorm.1} parent=11 // pred_check_branch
        %177 = sbr.rel (%p175) target = $region20
      $region19: #{avgpool_cat_batchnorm.1} parent=11 // pred_region
        _
      $region20: #{avgpool_cat_batchnorm.1} parent=11 // pred_fallthru
        _
    $region12: #{avgpool_cat_batchnorm.1} parent=5 // pred_fallthru
      _
    %p178 = scmp.lt.s32.totalorder %s11, 2
    // Predicated region
    $region21: #{avgpool_cat_batchnorm.1} parent=5 // pred_check
      %p179 = pneg %p178
    $region22: #{avgpool_cat_batchnorm.1} parent=5 // pred_check_branch
      %181 = sbr.rel (%p179) target = $region24
    $region23: #{avgpool_cat_batchnorm.1} parent=5 // pred_region
      // Predicated region
      $region25: #{avgpool_cat_batchnorm.1} parent=23 // pred_check
        %p182 = pneg %p52
      $region26: #{avgpool_cat_batchnorm.1} parent=23 // pred_check_branch
        %184 = sbr.rel (%p182) target = $region28
      $region27: #{avgpool_cat_batchnorm.1} parent=23 // pred_region
        %s185 = smul.u32 42, %s11
        %s186 = ssub.s32 80, %s185
        %p187 = scmp.lt.s32.totalorder %s186, 42
        %s188 = scalar_select %p187, %s186, 42
        %s189 = smul.u32 128, %s188
        %s190 = smul.u32 %s189, 2
        %p191 = scmp.lt.s32.totalorder %s185, 79
        %s192 = scalar_select %p191, %s185, 79
        %s193 = smul.addr %s192, 2
        %s194 = smul.addr %s193, 8
        %s195 = scalar_lea.vmem %s1, %s194
        %s196 = smul.u32 42, %s11
        %s197 = ssub.s32 80, %s196
        %p198 = scmp.lt.s32.totalorder %s197, 42
        %s199 = scalar_select %p198, %s197, 42
        %s200 = smul.u32 128, %s199
        %s201 = smul.u32 %s200, 2
      $region28: #{avgpool_cat_batchnorm.1} parent=23 // pred_fallthru
        _
      // Predicated region
      $region29: #{avgpool_cat_batchnorm.1} parent=23 // pred_check
        %p202 = pneg %p99
      $region30: #{avgpool_cat_batchnorm.1} parent=23 // pred_check_branch
        %204 = sbr.rel (%p202) target = $region32
      $region31: #{avgpool_cat_batchnorm.1} parent=23 // pred_region
        %s205 = smul.u32 42, %s11
        %p206 = scmp.lt.s32.totalorder %s205, 83
        %s207 = scalar_select %p206, %s205, 83
        %s208 = smul.addr %s207, 8
        %s209 = scalar_lea.vmem %s3, %s208
        %s210 = smul.u32 42, %s11
      $region32: #{avgpool_cat_batchnorm.1} parent=23 // pred_fallthru
        _
      // Predicated region
      $region33: #{avgpool_cat_batchnorm.1} parent=23 // pred_check
        %p211 = pneg %p125
      $region34: #{avgpool_cat_batchnorm.1} parent=23 // pred_check_branch
        %213 = sbr.rel (%p211) target = $region36
      $region35: #{avgpool_cat_batchnorm.1} parent=23 // pred_region
        %s214 = smul.u32 42, %s11
        %p215 = scmp.lt.s32.totalorder %s214, 83
        %s216 = scalar_select %p215, %s214, 83
        %s217 = smul.addr %s216, 8
        %s218 = scalar_lea.vmem %s4, %s217
        %s219 = smul.u32 42, %s11
      $region36: #{avgpool_cat_batchnorm.1} parent=23 // pred_fallthru
        _
    $region24: #{avgpool_cat_batchnorm.1} parent=5 // pred_fallthru
      _
    %p220 = scmp.le.s32.totalorder 1, %s11
    %p221 = scmp.lt.s32.totalorder %s11, 3
    %p222 = pnand %p220, %p221
    %p223 = pneg %p222
    // Predicated region
    $region37: #{avgpool_cat_batchnorm.1} parent=5 // pred_check
      _
    $region38: #{avgpool_cat_batchnorm.1} parent=5 // pred_check_branch
      %225 = sbr.rel (%p222) target = $region40
    $region39: #{avgpool_cat_batchnorm.1} parent=5 // pred_region
      %s226 = ssub.s32 %s11, 1
      %p227 = pneg %p32
      %p228 = pneg %p29
      %s229 = smul.u32 42, %s16
      %s230 = ssub.s32 80, %s229
      %p231 = scmp.lt.s32.totalorder %s230, 42
      %s232 = scalar_select %p231, %s230, 42
      %s233 = smul.u32 128, %s232
      %s234 = smul.u32 %s233, 2
      %p235 = scmp.lt.s32.totalorder %s229, 79
      %s236 = scalar_select %p235, %s229, 79
      %s237 = smul.addr %s236, 2
      %s238 = smul.addr %s237, 8
      %s239 = scalar_lea.vmem %s1, %s238
      %p240 = pneg %p58
      %p241 = pneg %p55
      %p242 = pneg %p79
      %p243 = pneg %p76
      %s244 = smul.u32 42, %s16
      %p245 = scmp.lt.s32.totalorder %s244, 83
      %s246 = scalar_select %p245, %s244, 83
      %s247 = smul.addr %s246, 8
      %s248 = scalar_lea.vmem %s3, %s247
      %p249 = pneg %p105
      %p250 = pneg %p102
      %s251 = smul.u32 42, %s16
      %p252 = scmp.lt.s32.totalorder %s251, 83
      %s253 = scalar_select %p252, %s251, 83
      %s254 = smul.addr %s253, 8
      %s255 = scalar_lea.vmem %s4, %s254
      %p256 = pneg %p131
      %p257 = pneg %p128
      %p258 = pneg %p157
      %p259 = pneg %p154
      %s260 = smul.u32 42, %s16
      %p261 = scmp.lt.s32.totalorder %s260, 83
      %s262 = scalar_select %p261, %s260, 83
      %s263 = smul.addr %s262, 8
      %s264 = scalar_lea.vmem %s5, %s263
      %s265 = smul.u32 42, %s16
      %s266 = ssub.s32 80, %s265
      %p267 = scmp.lt.s32.totalorder %s266, 42
      %s268 = scalar_select %p267, %s266, 42
      %s269 = smul.u32 128, %s268
      %s270 = smul.u32 %s269, 2
      %p271 = scmp.lt.s32.totalorder %s265, 79
      %s272 = scalar_select %p271, %s265, 79
      %s273 = smul.addr %s272, 2
      %s274 = smul.addr %s273, 8
      %s275 = scalar_lea.vmem %s1, %s274
      %s276 = smul.u32 42, %s16
      %s277 = ssub.s32 80, %s276
      %p278 = scmp.lt.s32.totalorder %s277, 42
      %s279 = scalar_select %p278, %s277, 42
      %s280 = smul.u32 128, %s279
      %s281 = smul.u32 %s280, 2
      %s282 = smul.u32 42, %s16
      %p283 = scmp.lt.s32.totalorder %s282, 83
      %s284 = scalar_select %p283, %s282, 83
      %s285 = smul.addr %s284, 8
      %s286 = scalar_lea.vmem %s3, %s285
      %s287 = smul.u32 42, %s16
      %s288 = smul.u32 42, %s16
      %p289 = scmp.lt.s32.totalorder %s288, 83
      %s290 = scalar_select %p289, %s288, 83
      %s291 = smul.addr %s290, 8
      %s292 = scalar_lea.vmem %s4, %s291
      %s293 = smul.u32 42, %s16
      %s294 = smul.u32 42, %s16
      %p295 = scmp.lt.s32.totalorder %s294, 83
      %s296 = scalar_select %p295, %s294, 83
      %s297 = smul.addr %s296, 8
      %s298 = scalar_lea.vmem %s5, %s297
      %s299 = smul.u32 42, %s16
      %v301 = vld [vmem:[%s275] sm:$0xff]
      %v302 = vld [vmem:[%s275 + $0x8] sm:$0xff]
      %v303 = vld [vmem:[%s275 + $0x10] sm:$0xff]
      %v304 = vld [vmem:[%s275 + $0x18] sm:$0xff]
      %v305 = vld [vmem:[%s275 + $0x20] sm:$0xff]
      %v306 = vld [vmem:[%s275 + $0x28] sm:$0xff]
      %v307 = vld [vmem:[%s275 + $0x30] sm:$0xff]
      %v308 = vld [vmem:[%s275 + $0x38] sm:$0xff]
      %v309 = vld [vmem:[%s275 + $0x40] sm:$0xff]
      %v310 = vld [vmem:[%s275 + $0x48] sm:$0xff]
      %v311 = vld [vmem:[%s275 + $0x50] sm:$0xff]
      %v312 = vld [vmem:[%s275 + $0x58] sm:$0xff]
      %v313 = vld [vmem:[%s275 + $0x60] sm:$0xff]
      %v314 = vld [vmem:[%s275 + $0x68] sm:$0xff]
      %v315 = vld [vmem:[%s275 + $0x70] sm:$0xff]
      %v316 = vld [vmem:[%s275 + $0x78] sm:$0xff]
      %v317 = vld [vmem:[%s275 + $0x80] sm:$0xff]
      %v318 = vld [vmem:[%s275 + $0x88] sm:$0xff]
      %v319 = vld [vmem:[%s275 + $0x90] sm:$0xff]
      %v320 = vld [vmem:[%s275 + $0x98] sm:$0xff]
      %v321 = vld [vmem:[%s275 + $0xa0] sm:$0xff]
      %v322 = vld [vmem:[%s275 + $0xa8] sm:$0xff]
      %v323 = vld [vmem:[%s275 + $0xb0] sm:$0xff]
      %v324 = vld [vmem:[%s275 + $0xb8] sm:$0xff]
      %v325 = vld [vmem:[%s275 + $0xc0] sm:$0xff]
      %v326 = vld [vmem:[%s275 + $0xc8] sm:$0xff]
      %v327 = vld [vmem:[%s275 + $0xd0] sm:$0xff]
      %v328 = vld [vmem:[%s275 + $0xd8] sm:$0xff]
      %v329 = vld [vmem:[%s275 + $0xe0] sm:$0xff]
      %v330 = vld [vmem:[%s275 + $0xe8] sm:$0xff]
      %v331 = vld [vmem:[%s275 + $0xf0] sm:$0xff]
      %v332 = vld [vmem:[%s275 + $0xf8] sm:$0xff]
      %v333 = vld [vmem:[%s275 + $0x100] sm:$0xff]
      %v334 = vld [vmem:[%s275 + $0x108] sm:$0xff]
      %v335 = vld [vmem:[%s275 + $0x110] sm:$0xff]
      %v336 = vld [vmem:[%s275 + $0x118] sm:$0xff]
      %v337 = vld [vmem:[%s275 + $0x120] sm:$0xff]
      %v338 = vld [vmem:[%s275 + $0x128] sm:$0xff]
      %v339 = vld [vmem:[%s275 + $0x130] sm:$0xff]
      %v340 = vld [vmem:[%s275 + $0x138] sm:$0xff]
      %v341 = vld [vmem:[%s275 + $0x140] sm:$0xff]
      %v342 = vld [vmem:[%s275 + $0x148] sm:$0xff]
      %v343 = vld [vmem:[%s275 + $0x150] sm:$0xff]
      %v344 = vld [vmem:[%s275 + $0x158] sm:$0xff]
      %v345 = vld [vmem:[%s275 + $0x160] sm:$0xff]
      %v346 = vld [vmem:[%s275 + $0x168] sm:$0xff]
      %v347 = vld [vmem:[%s275 + $0x170] sm:$0xff]
      %v348 = vld [vmem:[%s275 + $0x178] sm:$0xff]
      %v349 = vld [vmem:[%s275 + $0x180] sm:$0xff]
      %v350 = vld [vmem:[%s275 + $0x188] sm:$0xff]
      %v351 = vld [vmem:[%s275 + $0x190] sm:$0xff]
      %v352 = vld [vmem:[%s275 + $0x198] sm:$0xff]
      %v353 = vld [vmem:[%s275 + $0x1a0] sm:$0xff]
      %v354 = vld [vmem:[%s275 + $0x1a8] sm:$0xff]
      %v355 = vld [vmem:[%s275 + $0x1b0] sm:$0xff]
      %v356 = vld [vmem:[%s275 + $0x1b8] sm:$0xff]
      %v357 = vld [vmem:[%s275 + $0x1c0] sm:$0xff]
      %v358 = vld [vmem:[%s275 + $0x1c8] sm:$0xff]
      %v359 = vld [vmem:[%s275 + $0x1d0] sm:$0xff]
      %v360 = vld [vmem:[%s275 + $0x1d8] sm:$0xff]
      %v361 = vld [vmem:[%s275 + $0x1e0] sm:$0xff]
      %v362 = vld [vmem:[%s275 + $0x1e8] sm:$0xff]
      %v363 = vld [vmem:[%s275 + $0x1f0] sm:$0xff]
      %v364 = vld [vmem:[%s275 + $0x1f8] sm:$0xff]
      %v365 = vld [vmem:[%s275 + $0x200] sm:$0xff]
      %v366 = vld [vmem:[%s275 + $0x208] sm:$0xff]
      %v367 = vld [vmem:[%s275 + $0x210] sm:$0xff]
      %v368 = vld [vmem:[%s275 + $0x218] sm:$0xff]
      %v369 = vld [vmem:[%s275 + $0x220] sm:$0xff]
      %v370 = vld [vmem:[%s275 + $0x228] sm:$0xff]
      %v371 = vld [vmem:[%s275 + $0x230] sm:$0xff]
      %v372 = vld [vmem:[%s275 + $0x238] sm:$0xff]
      %v373 = vld [vmem:[%s275 + $0x240] sm:$0xff]
      %v374 = vld [vmem:[%s275 + $0x248] sm:$0xff]
      %v375 = vld [vmem:[%s275 + $0x250] sm:$0xff]
      %v376 = vld [vmem:[%s275 + $0x258] sm:$0xff]
      %v377 = vld [vmem:[%s275 + $0x260] sm:$0xff]
      %v378 = vld [vmem:[%s275 + $0x268] sm:$0xff]
      %v379 = vld [vmem:[%s275 + $0x270] sm:$0xff]
      %v380 = vld [vmem:[%s275 + $0x278] sm:$0xff]
      %v381 = vld [vmem:[%s275 + $0x280] sm:$0xff]
      %v382 = vld [vmem:[%s275 + $0x288] sm:$0xff]
      %v383 = vld [vmem:[%s275 + $0x290] sm:$0xff]
      %v384 = vld [vmem:[%s275 + $0x298] sm:$0xff]
      %v385 = vpack.c.bf16 %v303, %v301
      %v386 = vpack.c.bf16 %v304, %v302
      %v387 = vpack.c.bf16 %v307, %v305
      %v388 = vpack.c.bf16 %v308, %v306
      %v389 = vpack.c.bf16 %v311, %v309
      %v390 = vpack.c.bf16 %v312, %v310
      %v391 = vpack.c.bf16 %v315, %v313
      %v392 = vpack.c.bf16 %v316, %v314
      %v393 = vpack.c.bf16 %v319, %v317
      %v394 = vpack.c.bf16 %v320, %v318
      %v395 = vpack.c.bf16 %v323, %v321
      %v396 = vpack.c.bf16 %v324, %v322
      %v397 = vpack.c.bf16 %v327, %v325
      %v398 = vpack.c.bf16 %v328, %v326
      %v399 = vpack.c.bf16 %v331, %v329
      %v400 = vpack.c.bf16 %v332, %v330
      %v401 = vpack.c.bf16 %v335, %v333
      %v402 = vpack.c.bf16 %v336, %v334
      %v403 = vpack.c.bf16 %v339, %v337
      %v404 = vpack.c.bf16 %v340, %v338
      %v405 = vpack.c.bf16 %v343, %v341
      %v406 = vpack.c.bf16 %v344, %v342
      %v407 = vpack.c.bf16 %v347, %v345
      %v408 = vpack.c.bf16 %v348, %v346
      %v409 = vpack.c.bf16 %v351, %v349
      %v410 = vpack.c.bf16 %v352, %v350
      %v411 = vpack.c.bf16 %v355, %v353
      %v412 = vpack.c.bf16 %v356, %v354
      %v413 = vpack.c.bf16 %v359, %v357
      %v414 = vpack.c.bf16 %v360, %v358
      %v415 = vpack.c.bf16 %v363, %v361
      %v416 = vpack.c.bf16 %v364, %v362
      %v417 = vpack.c.bf16 %v367, %v365
      %v418 = vpack.c.bf16 %v368, %v366
      %v419 = vpack.c.bf16 %v371, %v369
      %v420 = vpack.c.bf16 %v372, %v370
      %v421 = vpack.c.bf16 %v375, %v373
      %v422 = vpack.c.bf16 %v376, %v374
      %v423 = vpack.c.bf16 %v379, %v377
      %v424 = vpack.c.bf16 %v380, %v378
      %v425 = vpack.c.bf16 %v383, %v381
      %v426 = vpack.c.bf16 %v384, %v382
      %v427 = vunpack.c.l.bf16 %v385
      %v428 = vunpack.c.l.bf16 %v386
      %v429 = vunpack.c.h.bf16 %v385
      %v430 = vunpack.c.h.bf16 %v386
      %v431 = vunpack.c.l.bf16 %v387
      %v432 = vunpack.c.l.bf16 %v388
      %v433 = vunpack.c.h.bf16 %v387
      %v434 = vunpack.c.h.bf16 %v388
      %v435 = vunpack.c.l.bf16 %v389
      %v436 = vunpack.c.l.bf16 %v390
      %v437 = vunpack.c.h.bf16 %v389
      %v438 = vunpack.c.h.bf16 %v390
      %v439 = vunpack.c.l.bf16 %v391
      %v440 = vunpack.c.l.bf16 %v392
      %v441 = vunpack.c.h.bf16 %v391
      %v442 = vunpack.c.h.bf16 %v392
      %v443 = vunpack.c.l.bf16 %v393
      %v444 = vunpack.c.l.bf16 %v394
      %v445 = vunpack.c.h.bf16 %v393
      %v446 = vunpack.c.h.bf16 %v394
      %v447 = vunpack.c.l.bf16 %v395
      %v448 = vunpack.c.l.bf16 %v396
      %v449 = vunpack.c.h.bf16 %v395
      %v450 = vunpack.c.h.bf16 %v396
      %v451 = vunpack.c.l.bf16 %v397
      %v452 = vunpack.c.l.bf16 %v398
      %v453 = vunpack.c.h.bf16 %v397
      %v454 = vunpack.c.h.bf16 %v398
      %v455 = vunpack.c.l.bf16 %v399
      %v456 = vunpack.c.l.bf16 %v400
      %v457 = vunpack.c.h.bf16 %v399
      %v458 = vunpack.c.h.bf16 %v400
      %v459 = vunpack.c.l.bf16 %v401
      %v460 = vunpack.c.l.bf16 %v402
      %v461 = vunpack.c.h.bf16 %v401
      %v462 = vunpack.c.h.bf16 %v402
      %v463 = vunpack.c.l.bf16 %v403
      %v464 = vunpack.c.l.bf16 %v404
      %v465 = vunpack.c.h.bf16 %v403
      %v466 = vunpack.c.h.bf16 %v404
      %v467 = vunpack.c.l.bf16 %v405
      %v468 = vunpack.c.l.bf16 %v406
      %v469 = vunpack.c.h.bf16 %v405
      %v470 = vunpack.c.h.bf16 %v406
      %v471 = vunpack.c.l.bf16 %v407
      %v472 = vunpack.c.l.bf16 %v408
      %v473 = vunpack.c.h.bf16 %v407
      %v474 = vunpack.c.h.bf16 %v408
      %v475 = vunpack.c.l.bf16 %v409
      %v476 = vunpack.c.l.bf16 %v410
      %v477 = vunpack.c.h.bf16 %v409
      %v478 = vunpack.c.h.bf16 %v410
      %v479 = vunpack.c.l.bf16 %v411
      %v480 = vunpack.c.l.bf16 %v412
      %v481 = vunpack.c.h.bf16 %v411
      %v482 = vunpack.c.h.bf16 %v412
      %v483 = vunpack.c.l.bf16 %v413
      %v484 = vunpack.c.l.bf16 %v414
      %v485 = vunpack.c.h.bf16 %v413
      %v486 = vunpack.c.h.bf16 %v414
      %v487 = vunpack.c.l.bf16 %v415
      %v488 = vunpack.c.l.bf16 %v416
      %v489 = vunpack.c.h.bf16 %v415
      %v490 = vunpack.c.h.bf16 %v416
      %v491 = vunpack.c.l.bf16 %v417
      %v492 = vunpack.c.l.bf16 %v418
      %v493 = vunpack.c.h.bf16 %v417
      %v494 = vunpack.c.h.bf16 %v418
      %v495 = vunpack.c.l.bf16 %v419
      %v496 = vunpack.c.l.bf16 %v420
      %v497 = vunpack.c.h.bf16 %v419
      %v498 = vunpack.c.h.bf16 %v420
      %v499 = vunpack.c.l.bf16 %v421
      %v500 = vunpack.c.l.bf16 %v422
      %v501 = vunpack.c.h.bf16 %v421
      %v502 = vunpack.c.h.bf16 %v422
      %v503 = vunpack.c.l.bf16 %v423
      %v504 = vunpack.c.l.bf16 %v424
      %v505 = vunpack.c.h.bf16 %v423
      %v506 = vunpack.c.h.bf16 %v424
      %v507 = vunpack.c.l.bf16 %v425
      %v508 = vunpack.c.l.bf16 %v426
      %v509 = vunpack.c.h.bf16 %v425
      %v510 = vunpack.c.h.bf16 %v426
      %v511 = vsub.f32 %v301, %v427
      %v512 = vsub.f32 %v302, %v428
      %v513 = vsub.f32 %v303, %v429
      %v514 = vsub.f32 %v304, %v430
      %v515 = vsub.f32 %v305, %v431
      %v516 = vsub.f32 %v306, %v432
      %v517 = vsub.f32 %v307, %v433
      %v518 = vsub.f32 %v308, %v434
      %v519 = vsub.f32 %v309, %v435
      %v520 = vsub.f32 %v310, %v436
      %v521 = vsub.f32 %v311, %v437
      %v522 = vsub.f32 %v312, %v438
      %v523 = vsub.f32 %v313, %v439
      %v524 = vsub.f32 %v314, %v440
      %v525 = vsub.f32 %v315, %v441
      %v526 = vsub.f32 %v316, %v442
      %v527 = vsub.f32 %v317, %v443
      %v528 = vsub.f32 %v318, %v444
      %v529 = vsub.f32 %v319, %v445
      %v530 = vsub.f32 %v320, %v446
      %v531 = vsub.f32 %v321, %v447
      %v532 = vsub.f32 %v322, %v448
      %v533 = vsub.f32 %v323, %v449
      %v534 = vsub.f32 %v324, %v450
      %v535 = vsub.f32 %v325, %v451
      %v536 = vsub.f32 %v326, %v452
      %v537 = vsub.f32 %v327, %v453
      %v538 = vsub.f32 %v328, %v454
      %v539 = vsub.f32 %v329, %v455
      %v540 = vsub.f32 %v330, %v456
      %v541 = vsub.f32 %v331, %v457
      %v542 = vsub.f32 %v332, %v458
      %v543 = vsub.f32 %v333, %v459
      %v544 = vsub.f32 %v334, %v460
      %v545 = vsub.f32 %v335, %v461
      %v546 = vsub.f32 %v336, %v462
      %v547 = vsub.f32 %v337, %v463
      %v548 = vsub.f32 %v338, %v464
      %v549 = vsub.f32 %v339, %v465
      %v550 = vsub.f32 %v340, %v466
      %v551 = vsub.f32 %v341, %v467
      %v552 = vsub.f32 %v342, %v468
      %v553 = vsub.f32 %v343, %v469
      %v554 = vsub.f32 %v344, %v470
      %v555 = vsub.f32 %v345, %v471
      %v556 = vsub.f32 %v346, %v472
      %v557 = vsub.f32 %v347, %v473
      %v558 = vsub.f32 %v348, %v474
      %v559 = vsub.f32 %v349, %v475
      %v560 = vsub.f32 %v350, %v476
      %v561 = vsub.f32 %v351, %v477
      %v562 = vsub.f32 %v352, %v478
      %v563 = vsub.f32 %v353, %v479
      %v564 = vsub.f32 %v354, %v480
      %v565 = vsub.f32 %v355, %v481
      %v566 = vsub.f32 %v356, %v482
      %v567 = vsub.f32 %v357, %v483
      %v568 = vsub.f32 %v358, %v484
      %v569 = vsub.f32 %v359, %v485
      %v570 = vsub.f32 %v360, %v486
      %v571 = vsub.f32 %v361, %v487
      %v572 = vsub.f32 %v362, %v488
      %v573 = vsub.f32 %v363, %v489
      %v574 = vsub.f32 %v364, %v490
      %v575 = vsub.f32 %v365, %v491
      %v576 = vsub.f32 %v366, %v492
      %v577 = vsub.f32 %v367, %v493
      %v578 = vsub.f32 %v368, %v494
      %v579 = vsub.f32 %v369, %v495
      %v580 = vsub.f32 %v370, %v496
      %v581 = vsub.f32 %v371, %v497
      %v582 = vsub.f32 %v372, %v498
      %v583 = vsub.f32 %v373, %v499
      %v584 = vsub.f32 %v374, %v500
      %v585 = vsub.f32 %v375, %v501
      %v586 = vsub.f32 %v376, %v502
      %v587 = vsub.f32 %v377, %v503
      %v588 = vsub.f32 %v378, %v504
      %v589 = vsub.f32 %v379, %v505
      %v590 = vsub.f32 %v380, %v506
      %v591 = vsub.f32 %v381, %v507
      %v592 = vsub.f32 %v382, %v508
      %v593 = vsub.f32 %v383, %v509
      %v594 = vsub.f32 %v384, %v510
      %v595 = vpack.c.bf16 %v513, %v511
      %v596 = vpack.c.bf16 %v514, %v512
      %v597 = vpack.c.bf16 %v517, %v515
      %v598 = vpack.c.bf16 %v518, %v516
      %v599 = vpack.c.bf16 %v521, %v519
      %v600 = vpack.c.bf16 %v522, %v520
      %v601 = vpack.c.bf16 %v525, %v523
      %v602 = vpack.c.bf16 %v526, %v524
      %v603 = vpack.c.bf16 %v529, %v527
      %v604 = vpack.c.bf16 %v530, %v528
      %v605 = vpack.c.bf16 %v533, %v531
      %v606 = vpack.c.bf16 %v534, %v532
      %v607 = vpack.c.bf16 %v537, %v535
      %v608 = vpack.c.bf16 %v538, %v536
      %v609 = vpack.c.bf16 %v541, %v539
      %v610 = vpack.c.bf16 %v542, %v540
      %v611 = vpack.c.bf16 %v545, %v543
      %v612 = vpack.c.bf16 %v546, %v544
      %v613 = vpack.c.bf16 %v549, %v547
      %v614 = vpack.c.bf16 %v550, %v548
      %v615 = vpack.c.bf16 %v553, %v551
      %v616 = vpack.c.bf16 %v554, %v552
      %v617 = vpack.c.bf16 %v557, %v555
      %v618 = vpack.c.bf16 %v558, %v556
      %v619 = vpack.c.bf16 %v561, %v559
      %v620 = vpack.c.bf16 %v562, %v560
      %v621 = vpack.c.bf16 %v565, %v563
      %v622 = vpack.c.bf16 %v566, %v564
      %v623 = vpack.c.bf16 %v569, %v567
      %v624 = vpack.c.bf16 %v570, %v568
      %v625 = vpack.c.bf16 %v573, %v571
      %v626 = vpack.c.bf16 %v574, %v572
      %v627 = vpack.c.bf16 %v577, %v575
      %v628 = vpack.c.bf16 %v578, %v576
      %v629 = vpack.c.bf16 %v581, %v579
      %v630 = vpack.c.bf16 %v582, %v580
      %v631 = vpack.c.bf16 %v585, %v583
      %v632 = vpack.c.bf16 %v586, %v584
      %v633 = vpack.c.bf16 %v589, %v587
      %v634 = vpack.c.bf16 %v590, %v588
      %v635 = vpack.c.bf16 %v593, %v591
      %v636 = vpack.c.bf16 %v594, %v592
      %v637 = vld [vmem:[%s0] sm:$0xf]
      %v638 = vld [vmem:[%s0 + $0x4] sm:$0xf]
      %v639 = vld [vmem:[%s0 + $0x8] sm:$0xf]
      %v640 = vld [vmem:[%s0 + $0xc] sm:$0xf]
      %v641 = vld [vmem:[%s0 + $0x10] sm:$0xf]
      %v642 = vld [vmem:[%s0 + $0x14] sm:$0xf]
      %v643 = vld [vmem:[%s0 + $0x18] sm:$0xf]
      %v644 = vld [vmem:[%s0 + $0x1c] sm:$0xf]
      %v645 = vld [vmem:[%s0 + $0x20] sm:$0xf]
      %v646 = vld [vmem:[%s0 + $0x24] sm:$0xf]
      %v647 = vld [vmem:[%s0 + $0x28] sm:$0xf]
      %v648 = vld [vmem:[%s0 + $0x2c] sm:$0xf]
      %v649 = vld [vmem:[%s0 + $0x30] sm:$0xf]
      %v650 = vld [vmem:[%s0 + $0x34] sm:$0xf]
      %v651 = vld [vmem:[%s0 + $0x38] sm:$0xf]
      %v652 = vld [vmem:[%s0 + $0x3c] sm:$0xf]
      %v653 = vld [vmem:[%s0 + $0x40] sm:$0xf]
      %v654 = vld [vmem:[%s0 + $0x44] sm:$0xf]
      %v655 = vld [vmem:[%s0 + $0x48] sm:$0xf]
      %v656 = vld [vmem:[%s0 + $0x4c] sm:$0xf]
      %v657 = vld [vmem:[%s0 + $0x50] sm:$0xf]
      %v658 = vld [vmem:[%s0 + $0x54] sm:$0xf]
      %v659 = vld [vmem:[%s0 + $0x58] sm:$0xf]
      %v660 = vld [vmem:[%s0 + $0x5c] sm:$0xf]
      %v661 = vld [vmem:[%s0 + $0x60] sm:$0x3]
      %v687 = vunpack.c.l.b16 %v637
      %v688 = vunpack.c.l.b16 %v638
      %v689 = vunpack.c.l.b16 %v639
      %v690 = vunpack.c.l.b16 %v640
      %v691 = vunpack.c.l.b16 %v641
      %v692 = vunpack.c.l.b16 %v642
      %v693 = vunpack.c.l.b16 %v643
      %v694 = vunpack.c.l.b16 %v644
      %v695 = vunpack.c.l.b16 %v645
      %v696 = vunpack.c.l.b16 %v646
      %v697 = vunpack.c.l.b16 %v647
      %v698 = vunpack.c.l.b16 %v648
      %v699 = vunpack.c.l.b16 %v649
      %v700 = vunpack.c.l.b16 %v650
      %v701 = vunpack.c.l.b16 %v651
      %v702 = vunpack.c.l.b16 %v652
      %v703 = vunpack.c.l.b16 %v653
      %v704 = vunpack.c.l.b16 %v654
      %v705 = vunpack.c.l.b16 %v655
      %v706 = vunpack.c.l.b16 %v656
      %v707 = vunpack.c.l.b16 %v657
      %v708 = vunpack.c.l.b16 %v658
      %v709 = vunpack.c.l.b16 %v659
      %v710 = vunpack.c.l.b16 %v660
      %v711 = vunpack.c.l.b16 %v661
      %v712 = vpack.c.b16 %v688, %v687
      %v713 = vpack.c.b16 %v690, %v689
      %v714 = vpack.c.b16 %v692, %v691
      %v715 = vpack.c.b16 %v694, %v693
      %v716 = vpack.c.b16 %v696, %v695
      %v717 = vpack.c.b16 %v698, %v697
      %v718 = vpack.c.b16 %v700, %v699
      %v719 = vpack.c.b16 %v702, %v701
      %v720 = vpack.c.b16 %v704, %v703
      %v721 = vpack.c.b16 %v706, %v705
      %v722 = vpack.c.b16 %v708, %v707
      %v723 = vpack.c.b16 %v710, %v709
      %v724 = vpack.c.b16 %v711, %v711
      %vm737 = vcmask 556032
      %v739 = vsel %vm737, %v596, 0
      %v742 = vsel %vm737, %v598, 0
      %v745 = vsel %vm737, %v600, 0
      %v748 = vsel %vm737, %v602, 0
      %v751 = vsel %vm737, %v604, 0
      %v754 = vsel %vm737, %v606, 0
      %v757 = vsel %vm737, %v608, 0
      %v760 = vsel %vm737, %v610, 0
      %v763 = vsel %vm737, %v612, 0
      %v766 = vsel %vm737, %v614, 0
      %v769 = vsel %vm737, %v616, 0
      %v772 = vsel %vm737, %v618, 0
      %v775 = vsel %vm737, %v620, 0
      %v778 = vsel %vm737, %v622, 0
      %v781 = vsel %vm737, %v624, 0
      %v784 = vsel %vm737, %v626, 0
      %v787 = vsel %vm737, %v628, 0
      %v790 = vsel %vm737, %v630, 0
      %v793 = vsel %vm737, %v632, 0
      %v796 = vsel %vm737, %v634, 0
      %v799 = vsel %vm737, %v636, 0
      %vm801 = vcmask 1041408
      %v803 = vsel %vm801, %v724, 0
      %805 = vmatprep.subr.bf16.mxu0 0
      %806 = vmatpush1.bf16.msra.mxu0 %v719
      %807 = vmatprep.subr.bf16.mxu0 0
      %808 = vmatpush1.bf16.msra.mxu0 %v718
      %809 = vmatprep.subr.bf16.mxu0 0
      %810 = vmatpush1.bf16.msra.mxu0 %v717
      %811 = vmatprep.subr.bf16.mxu0 0
      %812 = vmatpush1.bf16.msra.mxu0 %v716
      %813 = vmatprep.subr.bf16.mxu0 0
      %814 = vmatpush1.bf16.msra.mxu0 %v715
      %815 = vmatprep.subr.bf16.mxu0 0
      %816 = vmatpush1.bf16.msra.mxu0 %v714
      %817 = vmatprep.subr.bf16.mxu0 0
      %818 = vmatpush1.bf16.msra.mxu0 %v713
      %819 = vmatprep.subr.bf16.mxu0 0
      %820 = vmatpush1.bf16.msra.mxu0 %v712
      %821 = vmatprep.subr.bf16.mxu0 0
      %822 = vmatpush2.bf16.msra.mxu0 0
      %823 = vmatprep.subr.bf16.mxu0 0
      %824 = vmatpush2.bf16.msra.mxu0 0
      %825 = vmatprep.subr.bf16.mxu0 0
      %826 = vmatpush2.bf16.msra.mxu0 0
      %827 = vmatprep.subr.bf16.mxu0 0
      %828 = vmatpush2.bf16.msra.mxu0 %v803
      %829 = vmatprep.subr.bf16.mxu0 0
      %830 = vmatpush2.bf16.msra.mxu0 %v723
      %831 = vmatprep.subr.bf16.mxu0 0
      %832 = vmatpush2.bf16.msra.mxu0 %v722
      %833 = vmatprep.subr.bf16.mxu0 0
      %834 = vmatpush2.bf16.msra.mxu0 %v721
      %835 = vmatprep.subr.bf16.mxu0 0
      %836 = vmatpush2.bf16.msra.mxu0 %v720
      %837 = vmatprep.mubr.bf16.mxu0 %v739
      %838 = vmatmul.mubr.bf16.gmra.mxu0 %v595
      %v839 = vpop.f32.mrf.mxu0
      %v840 = vadd.f32 0.0, %v839
      %v841 = vpop.f32.mrf.mxu0
      %v842 = vpop.f32.mrf.mxu0
      %v843 = vadd.f32 0.0, %v842
      %v844 = vpop.f32.mrf.mxu0
      %845 = vmatprep.mubr.bf16.mxu0 %v742
      %846 = vmatmul.mubr.bf16.gmra.mxu0 %v597
      %v847 = vpop.f32.mrf.mxu0
      %v848 = vadd.f32 0.0, %v847
      %v849 = vpop.f32.mrf.mxu0
      %v850 = vpop.f32.mrf.mxu0
      %v851 = vadd.f32 0.0, %v850
      %v852 = vpop.f32.mrf.mxu0
      %853 = vmatprep.mubr.bf16.mxu0 %v745
      %854 = vmatmul.mubr.bf16.gmra.mxu0 %v599
      %v855 = vpop.f32.mrf.mxu0
      %v856 = vadd.f32 0.0, %v855
      %v857 = vpop.f32.mrf.mxu0
      %v858 = vpop.f32.mrf.mxu0
      %v859 = vadd.f32 0.0, %v858
      %v860 = vpop.f32.mrf.mxu0
      %861 = vmatprep.mubr.bf16.mxu0 %v748
      %862 = vmatmul.mubr.bf16.gmra.mxu0 %v601
      %v863 = vpop.f32.mrf.mxu0
      %v864 = vadd.f32 0.0, %v863
      %v865 = vpop.f32.mrf.mxu0
      %v866 = vpop.f32.mrf.mxu0
      %v867 = vadd.f32 0.0, %v866
      %v868 = vpop.f32.mrf.mxu0
      %869 = vmatprep.mubr.bf16.mxu0 %v751
      %870 = vmatmul.mubr.bf16.gmra.mxu0 %v603
      %v871 = vpop.f32.mrf.mxu0
      %v872 = vadd.f32 0.0, %v871
      %v873 = vpop.f32.mrf.mxu0
      %v874 = vpop.f32.mrf.mxu0
      %v875 = vadd.f32 0.0, %v874
      %v876 = vpop.f32.mrf.mxu0
      %877 = vmatprep.mubr.bf16.mxu0 %v754
      %878 = vmatmul.mubr.bf16.gmra.mxu0 %v605
      %v879 = vpop.f32.mrf.mxu0
      %v880 = vadd.f32 0.0, %v879
      %v881 = vpop.f32.mrf.mxu0
      %v882 = vpop.f32.mrf.mxu0
      %v883 = vadd.f32 0.0, %v882
      %v884 = vpop.f32.mrf.mxu0
      %885 = vmatprep.mubr.bf16.mxu0 %v757
      %886 = vmatmul.mubr.bf16.gmra.mxu0 %v607
      %v887 = vpop.f32.mrf.mxu0
      %v888 = vadd.f32 0.0, %v887
      %v889 = vpop.f32.mrf.mxu0
      %v890 = vpop.f32.mrf.mxu0
      %v891 = vadd.f32 0.0, %v890
      %v892 = vpop.f32.mrf.mxu0
      %893 = vmatprep.mubr.bf16.mxu0 %v760
      %894 = vmatmul.mubr.bf16.gmra.mxu0 %v609
      %v895 = vpop.f32.mrf.mxu0
      %v896 = vadd.f32 0.0, %v895
      %v897 = vpop.f32.mrf.mxu0
      %v898 = vpop.f32.mrf.mxu0
      %v899 = vadd.f32 0.0, %v898
      %v900 = vpop.f32.mrf.mxu0
      %901 = vmatprep.mubr.bf16.mxu0 %v763
      %902 = vmatmul.mubr.bf16.gmra.mxu0 %v611
      %v903 = vpop.f32.mrf.mxu0
      %v904 = vadd.f32 0.0, %v903
      %v905 = vpop.f32.mrf.mxu0
      %v906 = vpop.f32.mrf.mxu0
      %v907 = vadd.f32 0.0, %v906
      %v908 = vpop.f32.mrf.mxu0
      %909 = vmatprep.mubr.bf16.mxu0 %v766
      %910 = vmatmul.mubr.bf16.gmra.mxu0 %v613
      %v911 = vpop.f32.mrf.mxu0
      %v912 = vadd.f32 0.0, %v911
      %v913 = vpop.f32.mrf.mxu0
      %v914 = vpop.f32.mrf.mxu0
      %v915 = vadd.f32 0.0, %v914
      %v916 = vpop.f32.mrf.mxu0
      %917 = vmatprep.mubr.bf16.mxu0 %v769
      %918 = vmatmul.mubr.bf16.gmra.mxu0 %v615
      %v919 = vpop.f32.mrf.mxu0
      %v920 = vadd.f32 0.0, %v919
      %v921 = vpop.f32.mrf.mxu0
      %v922 = vpop.f32.mrf.mxu0
      %v923 = vadd.f32 0.0, %v922
      %v924 = vpop.f32.mrf.mxu0
      %925 = vmatprep.mubr.bf16.mxu0 %v772
      %926 = vmatmul.mubr.bf16.gmra.mxu0 %v617
      %v927 = vpop.f32.mrf.mxu0
      %v928 = vadd.f32 0.0, %v927
      %v929 = vpop.f32.mrf.mxu0
      %v930 = vpop.f32.mrf.mxu0
      %v931 = vadd.f32 0.0, %v930
      %v932 = vpop.f32.mrf.mxu0
      %933 = vmatprep.mubr.bf16.mxu0 %v775
      %934 = vmatmul.mubr.bf16.gmra.mxu0 %v619
      %v935 = vpop.f32.mrf.mxu0
      %v936 = vadd.f32 0.0, %v935
      %v937 = vpop.f32.mrf.mxu0
      %v938 = vpop.f32.mrf.mxu0
      %v939 = vadd.f32 0.0, %v938
      %v940 = vpop.f32.mrf.mxu0
      %941 = vmatprep.mubr.bf16.mxu0 %v778
      %942 = vmatmul.mubr.bf16.gmra.mxu0 %v621
      %v943 = vpop.f32.mrf.mxu0
      %v944 = vadd.f32 0.0, %v943
      %v945 = vpop.f32.mrf.mxu0
      %v946 = vpop.f32.mrf.mxu0
      %v947 = vadd.f32 0.0, %v946
      %v948 = vpop.f32.mrf.mxu0
      %949 = vmatprep.mubr.bf16.mxu0 %v781
      %950 = vmatmul.mubr.bf16.gmra.mxu0 %v623
      %v951 = vpop.f32.mrf.mxu0
      %v952 = vadd.f32 0.0, %v951
      %v953 = vpop.f32.mrf.mxu0
      %v954 = vpop.f32.mrf.mxu0
      %v955 = vadd.f32 0.0, %v954
      %v956 = vpop.f32.mrf.mxu0
      %957 = vmatprep.mubr.bf16.mxu0 %v784
      %958 = vmatmul.mubr.bf16.gmra.mxu0 %v625
      %v959 = vpop.f32.mrf.mxu0
      %v960 = vadd.f32 0.0, %v959
      %v961 = vpop.f32.mrf.mxu0
      %v962 = vpop.f32.mrf.mxu0
      %v963 = vadd.f32 0.0, %v962
      %v964 = vpop.f32.mrf.mxu0
      %965 = vmatprep.mubr.bf16.mxu0 %v787
      %966 = vmatmul.mubr.bf16.gmra.mxu0 %v627
      %v967 = vpop.f32.mrf.mxu0
      %v968 = vadd.f32 0.0, %v967
      %v969 = vpop.f32.mrf.mxu0
      %v970 = vpop.f32.mrf.mxu0
      %v971 = vadd.f32 0.0, %v970
      %v972 = vpop.f32.mrf.mxu0
      %973 = vmatprep.mubr.bf16.mxu0 %v790
      %974 = vmatmul.mubr.bf16.gmra.mxu0 %v629
      %v975 = vpop.f32.mrf.mxu0
      %v976 = vadd.f32 0.0, %v975
      %v977 = vpop.f32.mrf.mxu0
      %v978 = vpop.f32.mrf.mxu0
      %v979 = vadd.f32 0.0, %v978
      %v980 = vpop.f32.mrf.mxu0
      %981 = vmatprep.mubr.bf16.mxu0 %v793
      %982 = vmatmul.mubr.bf16.gmra.mxu0 %v631
      %v983 = vpop.f32.mrf.mxu0
      %v984 = vadd.f32 0.0, %v983
      %v985 = vpop.f32.mrf.mxu0
      %v986 = vpop.f32.mrf.mxu0
      %v987 = vadd.f32 0.0, %v986
      %v988 = vpop.f32.mrf.mxu0
      %989 = vmatprep.mubr.bf16.mxu0 %v796
      %990 = vmatmul.mubr.bf16.gmra.mxu0 %v633
      %v991 = vpop.f32.mrf.mxu0
      %v992 = vadd.f32 0.0, %v991
      %v993 = vpop.f32.mrf.mxu0
      %v994 = vpop.f32.mrf.mxu0
      %v995 = vadd.f32 0.0, %v994
      %v996 = vpop.f32.mrf.mxu0
      %997 = vmatprep.mubr.bf16.mxu0 %v799
      %998 = vmatmul.mubr.bf16.gmra.mxu0 %v635
      %v999 = vpop.f32.mrf.mxu0
      %v1000 = vadd.f32 0.0, %v999
      %v1001 = vpop.f32.mrf.mxu0
      %v1002 = vpop.f32.mrf.mxu0
      %v1003 = vadd.f32 0.0, %v1002
      %v1004 = vpop.f32.mrf.mxu0
      %1005 = vdwg.mxu0
      %v1007 = vsel %vm737, %v386, 0
      %v1010 = vsel %vm737, %v388, 0
      %v1013 = vsel %vm737, %v390, 0
      %v1016 = vsel %vm737, %v392, 0
      %v1019 = vsel %vm737, %v394, 0
      %v1022 = vsel %vm737, %v396, 0
      %v1025 = vsel %vm737, %v398, 0
      %v1028 = vsel %vm737, %v400, 0
      %v1031 = vsel %vm737, %v402, 0
      %v1034 = vsel %vm737, %v404, 0
      %v1037 = vsel %vm737, %v406, 0
      %v1040 = vsel %vm737, %v408, 0
      %v1043 = vsel %vm737, %v410, 0
      %v1046 = vsel %vm737, %v412, 0
      %v1049 = vsel %vm737, %v414, 0
      %v1052 = vsel %vm737, %v416, 0
      %v1055 = vsel %vm737, %v418, 0
      %v1058 = vsel %vm737, %v420, 0
      %v1061 = vsel %vm737, %v422, 0
      %v1064 = vsel %vm737, %v424, 0
      %v1067 = vsel %vm737, %v426, 0
      %1069 = vmatprep.subr.bf16.mxu0 0
      %1070 = vmatpush1.bf16.msra.mxu0 %v719
      %1071 = vmatprep.subr.bf16.mxu0 0
      %1072 = vmatpush1.bf16.msra.mxu0 %v718
      %1073 = vmatprep.subr.bf16.mxu0 0
      %1074 = vmatpush1.bf16.msra.mxu0 %v717
      %1075 = vmatprep.subr.bf16.mxu0 0
      %1076 = vmatpush1.bf16.msra.mxu0 %v716
      %1077 = vmatprep.subr.bf16.mxu0 0
      %1078 = vmatpush1.bf16.msra.mxu0 %v715
      %1079 = vmatprep.subr.bf16.mxu0 0
      %1080 = vmatpush1.bf16.msra.mxu0 %v714
      %1081 = vmatprep.subr.bf16.mxu0 0
      %1082 = vmatpush1.bf16.msra.mxu0 %v713
      %1083 = vmatprep.subr.bf16.mxu0 0
      %1084 = vmatpush1.bf16.msra.mxu0 %v712
      %1085 = vmatprep.subr.bf16.mxu0 0
      %1086 = vmatpush2.bf16.msra.mxu0 0
      %1087 = vmatprep.subr.bf16.mxu0 0
      %1088 = vmatpush2.bf16.msra.mxu0 0
      %1089 = vmatprep.subr.bf16.mxu0 0
      %1090 = vmatpush2.bf16.msra.mxu0 0
      %1091 = vmatprep.subr.bf16.mxu0 0
      %1092 = vmatpush2.bf16.msra.mxu0 %v803
      %1093 = vmatprep.subr.bf16.mxu0 0
      %1094 = vmatpush2.bf16.msra.mxu0 %v723
      %1095 = vmatprep.subr.bf16.mxu0 0
      %1096 = vmatpush2.bf16.msra.mxu0 %v722
      %1097 = vmatprep.subr.bf16.mxu0 0
      %1098 = vmatpush2.bf16.msra.mxu0 %v721
      %1099 = vmatprep.subr.bf16.mxu0 0
      %1100 = vmatpush2.bf16.msra.mxu0 %v720
      %1101 = vmatprep.mubr.bf16.mxu0 %v1007
      %1102 = vmatmul.mubr.bf16.gmra.mxu0 %v385
      %v1103 = vpop.f32.mrf.mxu0
      %v1104 = vadd.f32 %v840, %v1103
      %v1105 = vpop.f32.mrf.mxu0
      %v1106 = vpop.f32.mrf.mxu0
      %v1107 = vadd.f32 %v843, %v1106
      %v1108 = vpop.f32.mrf.mxu0
      %1109 = vmatprep.mubr.bf16.mxu0 %v1010
      %1110 = vmatmul.mubr.bf16.gmra.mxu0 %v387
      %v1111 = vpop.f32.mrf.mxu0
      %v1112 = vadd.f32 %v848, %v1111
      %v1113 = vpop.f32.mrf.mxu0
      %v1114 = vpop.f32.mrf.mxu0
      %v1115 = vadd.f32 %v851, %v1114
      %v1116 = vpop.f32.mrf.mxu0
      %1117 = vmatprep.mubr.bf16.mxu0 %v1013
      %1118 = vmatmul.mubr.bf16.gmra.mxu0 %v389
      %v1119 = vpop.f32.mrf.mxu0
      %v1120 = vadd.f32 %v856, %v1119
      %v1121 = vpop.f32.mrf.mxu0
      %v1122 = vpop.f32.mrf.mxu0
      %v1123 = vadd.f32 %v859, %v1122
      %v1124 = vpop.f32.mrf.mxu0
      %1125 = vmatprep.mubr.bf16.mxu0 %v1016
      %1126 = vmatmul.mubr.bf16.gmra.mxu0 %v391
      %v1127 = vpop.f32.mrf.mxu0
      %v1128 = vadd.f32 %v864, %v1127
      %v1129 = vpop.f32.mrf.mxu0
      %v1130 = vpop.f32.mrf.mxu0
      %v1131 = vadd.f32 %v867, %v1130
      %v1132 = vpop.f32.mrf.mxu0
      %1133 = vmatprep.mubr.bf16.mxu0 %v1019
      %1134 = vmatmul.mubr.bf16.gmra.mxu0 %v393
      %v1135 = vpop.f32.mrf.mxu0
      %v1136 = vadd.f32 %v872, %v1135
      %v1137 = vpop.f32.mrf.mxu0
      %v1138 = vpop.f32.mrf.mxu0
      %v1139 = vadd.f32 %v875, %v1138
      %v1140 = vpop.f32.mrf.mxu0
      %1141 = vmatprep.mubr.bf16.mxu0 %v1022
      %1142 = vmatmul.mubr.bf16.gmra.mxu0 %v395
      %v1143 = vpop.f32.mrf.mxu0
      %v1144 = vadd.f32 %v880, %v1143
      %v1145 = vpop.f32.mrf.mxu0
      %v1146 = vpop.f32.mrf.mxu0
      %v1147 = vadd.f32 %v883, %v1146
      %v1148 = vpop.f32.mrf.mxu0
      %1149 = vmatprep.mubr.bf16.mxu0 %v1025
      %1150 = vmatmul.mubr.bf16.gmra.mxu0 %v397
      %v1151 = vpop.f32.mrf.mxu0
      %v1152 = vadd.f32 %v888, %v1151
      %v1153 = vpop.f32.mrf.mxu0
      %v1154 = vpop.f32.mrf.mxu0
      %v1155 = vadd.f32 %v891, %v1154
      %v1156 = vpop.f32.mrf.mxu0
      %1157 = vmatprep.mubr.bf16.mxu0 %v1028
      %1158 = vmatmul.mubr.bf16.gmra.mxu0 %v399
      %v1159 = vpop.f32.mrf.mxu0
      %v1160 = vadd.f32 %v896, %v1159
      %v1161 = vpop.f32.mrf.mxu0
      %v1162 = vpop.f32.mrf.mxu0
      %v1163 = vadd.f32 %v899, %v1162
      %v1164 = vpop.f32.mrf.mxu0
      %1165 = vmatprep.mubr.bf16.mxu0 %v1031
      %1166 = vmatmul.mubr.bf16.gmra.mxu0 %v401
      %v1167 = vpop.f32.mrf.mxu0
      %v1168 = vadd.f32 %v904, %v1167
      %v1169 = vpop.f32.mrf.mxu0
      %v1170 = vpop.f32.mrf.mxu0
      %v1171 = vadd.f32 %v907, %v1170
      %v1172 = vpop.f32.mrf.mxu0
      %1173 = vmatprep.mubr.bf16.mxu0 %v1034
      %1174 = vmatmul.mubr.bf16.gmra.mxu0 %v403
      %v1175 = vpop.f32.mrf.mxu0
      %v1176 = vadd.f32 %v912, %v1175
      %v1177 = vpop.f32.mrf.mxu0
      %v1178 = vpop.f32.mrf.mxu0
      %v1179 = vadd.f32 %v915, %v1178
      %v1180 = vpop.f32.mrf.mxu0
      %1181 = vmatprep.mubr.bf16.mxu0 %v1037
      %1182 = vmatmul.mubr.bf16.gmra.mxu0 %v405
      %v1183 = vpop.f32.mrf.mxu0
      %v1184 = vadd.f32 %v920, %v1183
      %v1185 = vpop.f32.mrf.mxu0
      %v1186 = vpop.f32.mrf.mxu0
      %v1187 = vadd.f32 %v923, %v1186
      %v1188 = vpop.f32.mrf.mxu0
      %1189 = vmatprep.mubr.bf16.mxu0 %v1040
      %1190 = vmatmul.mubr.bf16.gmra.mxu0 %v407
      %v1191 = vpop.f32.mrf.mxu0
      %v1192 = vadd.f32 %v928, %v1191
      %v1193 = vpop.f32.mrf.mxu0
      %v1194 = vpop.f32.mrf.mxu0
      %v1195 = vadd.f32 %v931, %v1194
      %v1196 = vpop.f32.mrf.mxu0
      %1197 = vmatprep.mubr.bf16.mxu0 %v1043
      %1198 = vmatmul.mubr.bf16.gmra.mxu0 %v409
      %v1199 = vpop.f32.mrf.mxu0
      %v1200 = vadd.f32 %v936, %v1199
      %v1201 = vpop.f32.mrf.mxu0
      %v1202 = vpop.f32.mrf.mxu0
      %v1203 = vadd.f32 %v939, %v1202
      %v1204 = vpop.f32.mrf.mxu0
      %1205 = vmatprep.mubr.bf16.mxu0 %v1046
      %1206 = vmatmul.mubr.bf16.gmra.mxu0 %v411
      %v1207 = vpop.f32.mrf.mxu0
      %v1208 = vadd.f32 %v944, %v1207
      %v1209 = vpop.f32.mrf.mxu0
      %v1210 = vpop.f32.mrf.mxu0
      %v1211 = vadd.f32 %v947, %v1210
      %v1212 = vpop.f32.mrf.mxu0
      %1213 = vmatprep.mubr.bf16.mxu0 %v1049
      %1214 = vmatmul.mubr.bf16.gmra.mxu0 %v413
      %v1215 = vpop.f32.mrf.mxu0
      %v1216 = vadd.f32 %v952, %v1215
      %v1217 = vpop.f32.mrf.mxu0
      %v1218 = vpop.f32.mrf.mxu0
      %v1219 = vadd.f32 %v955, %v1218
      %v1220 = vpop.f32.mrf.mxu0
      %1221 = vmatprep.mubr.bf16.mxu0 %v1052
      %1222 = vmatmul.mubr.bf16.gmra.mxu0 %v415
      %v1223 = vpop.f32.mrf.mxu0
      %v1224 = vadd.f32 %v960, %v1223
      %v1225 = vpop.f32.mrf.mxu0
      %v1226 = vpop.f32.mrf.mxu0
      %v1227 = vadd.f32 %v963, %v1226
      %v1228 = vpop.f32.mrf.mxu0
      %1229 = vmatprep.mubr.bf16.mxu0 %v1055
      %1230 = vmatmul.mubr.bf16.gmra.mxu0 %v417
      %v1231 = vpop.f32.mrf.mxu0
      %v1232 = vadd.f32 %v968, %v1231
      %v1233 = vpop.f32.mrf.mxu0
      %v1234 = vpop.f32.mrf.mxu0
      %v1235 = vadd.f32 %v971, %v1234
      %v1236 = vpop.f32.mrf.mxu0
      %1237 = vmatprep.mubr.bf16.mxu0 %v1058
      %1238 = vmatmul.mubr.bf16.gmra.mxu0 %v419
      %v1239 = vpop.f32.mrf.mxu0
      %v1240 = vadd.f32 %v976, %v1239
      %v1241 = vpop.f32.mrf.mxu0
      %v1242 = vpop.f32.mrf.mxu0
      %v1243 = vadd.f32 %v979, %v1242
      %v1244 = vpop.f32.mrf.mxu0
      %1245 = vmatprep.mubr.bf16.mxu0 %v1061
      %1246 = vmatmul.mubr.bf16.gmra.mxu0 %v421
      %v1247 = vpop.f32.mrf.mxu0
      %v1248 = vadd.f32 %v984, %v1247
      %v1249 = vpop.f32.mrf.mxu0
      %v1250 = vpop.f32.mrf.mxu0
      %v1251 = vadd.f32 %v987, %v1250
      %v1252 = vpop.f32.mrf.mxu0
      %1253 = vmatprep.mubr.bf16.mxu0 %v1064
      %1254 = vmatmul.mubr.bf16.gmra.mxu0 %v423
      %v1255 = vpop.f32.mrf.mxu0
      %v1256 = vadd.f32 %v992, %v1255
      %v1257 = vpop.f32.mrf.mxu0
      %v1258 = vpop.f32.mrf.mxu0
      %v1259 = vadd.f32 %v995, %v1258
      %v1260 = vpop.f32.mrf.mxu0
      %1261 = vmatprep.mubr.bf16.mxu0 %v1067
      %1262 = vmatmul.mubr.bf16.gmra.mxu0 %v425
      %v1263 = vpop.f32.mrf.mxu0
      %v1264 = vadd.f32 %v1000, %v1263
      %v1265 = vpop.f32.mrf.mxu0
      %v1266 = vpop.f32.mrf.mxu0
      %v1267 = vadd.f32 %v1003, %v1266
      %v1268 = vpop.f32.mrf.mxu0
      %1269 = vdwg.mxu0
      %v1270 = vld [vmem:[%s286] sm:$0xff]
      %v1271 = vld [vmem:[%s286 + $0x8] sm:$0xff]
      %v1272 = vld [vmem:[%s286 + $0x10] sm:$0xff]
      %v1273 = vld [vmem:[%s286 + $0x18] sm:$0xff]
      %v1274 = vld [vmem:[%s286 + $0x20] sm:$0xff]
      %v1275 = vld [vmem:[%s286 + $0x28] sm:$0xff]
      %v1276 = vld [vmem:[%s286 + $0x30] sm:$0xff]
      %v1277 = vld [vmem:[%s286 + $0x38] sm:$0xff]
      %v1278 = vld [vmem:[%s286 + $0x40] sm:$0xff]
      %v1279 = vld [vmem:[%s286 + $0x48] sm:$0xff]
      %v1280 = vld [vmem:[%s286 + $0x50] sm:$0xff]
      %v1281 = vld [vmem:[%s286 + $0x58] sm:$0xff]
      %v1282 = vld [vmem:[%s286 + $0x60] sm:$0xff]
      %v1283 = vld [vmem:[%s286 + $0x68] sm:$0xff]
      %v1284 = vld [vmem:[%s286 + $0x70] sm:$0xff]
      %v1285 = vld [vmem:[%s286 + $0x78] sm:$0xff]
      %v1286 = vld [vmem:[%s286 + $0x80] sm:$0xff]
      %v1287 = vld [vmem:[%s286 + $0x88] sm:$0xff]
      %v1288 = vld [vmem:[%s286 + $0x90] sm:$0xff]
      %v1289 = vld [vmem:[%s286 + $0x98] sm:$0xff]
      %v1290 = vld [vmem:[%s286 + $0xa0] sm:$0xff]
      %v1291 = vld [vmem:[%s286 + $0xa8] sm:$0xff]
      %v1292 = vld [vmem:[%s286 + $0xb0] sm:$0xff]
      %v1293 = vld [vmem:[%s286 + $0xb8] sm:$0xff]
      %v1294 = vld [vmem:[%s286 + $0xc0] sm:$0xff]
      %v1295 = vld [vmem:[%s286 + $0xc8] sm:$0xff]
      %v1296 = vld [vmem:[%s286 + $0xd0] sm:$0xff]
      %v1297 = vld [vmem:[%s286 + $0xd8] sm:$0xff]
      %v1298 = vld [vmem:[%s286 + $0xe0] sm:$0xff]
      %v1299 = vld [vmem:[%s286 + $0xe8] sm:$0xff]
      %v1300 = vld [vmem:[%s286 + $0xf0] sm:$0xff]
      %v1301 = vld [vmem:[%s286 + $0xf8] sm:$0xff]
      %v1302 = vld [vmem:[%s286 + $0x100] sm:$0xff]
      %v1303 = vld [vmem:[%s286 + $0x108] sm:$0xff]
      %v1304 = vld [vmem:[%s286 + $0x110] sm:$0xff]
      %v1305 = vld [vmem:[%s286 + $0x118] sm:$0xff]
      %v1306 = vld [vmem:[%s286 + $0x120] sm:$0xff]
      %v1307 = vld [vmem:[%s286 + $0x128] sm:$0xff]
      %v1308 = vld [vmem:[%s286 + $0x130] sm:$0xff]
      %v1309 = vld [vmem:[%s286 + $0x138] sm:$0xff]
      %v1310 = vld [vmem:[%s286 + $0x140] sm:$0xff]
      %v1311 = vld [vmem:[%s286 + $0x148] sm:$0xff]
      %v1312 = vld [vmem:[%s292] sm:$0xff]
      %v1313 = vld [vmem:[%s292 + $0x8] sm:$0xff]
      %v1314 = vld [vmem:[%s292 + $0x10] sm:$0xff]
      %v1315 = vld [vmem:[%s292 + $0x18] sm:$0xff]
      %v1316 = vld [vmem:[%s292 + $0x20] sm:$0xff]
      %v1317 = vld [vmem:[%s292 + $0x28] sm:$0xff]
      %v1318 = vld [vmem:[%s292 + $0x30] sm:$0xff]
      %v1319 = vld [vmem:[%s292 + $0x38] sm:$0xff]
      %v1320 = vld [vmem:[%s292 + $0x40] sm:$0xff]
      %v1321 = vld [vmem:[%s292 + $0x48] sm:$0xff]
      %v1322 = vld [vmem:[%s292 + $0x50] sm:$0xff]
      %v1323 = vld [vmem:[%s292 + $0x58] sm:$0xff]
      %v1324 = vld [vmem:[%s292 + $0x60] sm:$0xff]
      %v1325 = vld [vmem:[%s292 + $0x68] sm:$0xff]
      %v1326 = vld [vmem:[%s292 + $0x70] sm:$0xff]
      %v1327 = vld [vmem:[%s292 + $0x78] sm:$0xff]
      %v1328 = vld [vmem:[%s292 + $0x80] sm:$0xff]
      %v1329 = vld [vmem:[%s292 + $0x88] sm:$0xff]
      %v1330 = vld [vmem:[%s292 + $0x90] sm:$0xff]
      %v1331 = vld [vmem:[%s292 + $0x98] sm:$0xff]
      %v1332 = vld [vmem:[%s292 + $0xa0] sm:$0xff]
      %v1333 = vld [vmem:[%s292 + $0xa8] sm:$0xff]
      %v1334 = vld [vmem:[%s292 + $0xb0] sm:$0xff]
      %v1335 = vld [vmem:[%s292 + $0xb8] sm:$0xff]
      %v1336 = vld [vmem:[%s292 + $0xc0] sm:$0xff]
      %v1337 = vld [vmem:[%s292 + $0xc8] sm:$0xff]
      %v1338 = vld [vmem:[%s292 + $0xd0] sm:$0xff]
      %v1339 = vld [vmem:[%s292 + $0xd8] sm:$0xff]
      %v1340 = vld [vmem:[%s292 + $0xe0] sm:$0xff]
      %v1341 = vld [vmem:[%s292 + $0xe8] sm:$0xff]
      %v1342 = vld [vmem:[%s292 + $0xf0] sm:$0xff]
      %v1343 = vld [vmem:[%s292 + $0xf8] sm:$0xff]
      %v1344 = vld [vmem:[%s292 + $0x100] sm:$0xff]
      %v1345 = vld [vmem:[%s292 + $0x108] sm:$0xff]
      %v1346 = vld [vmem:[%s292 + $0x110] sm:$0xff]
      %v1347 = vld [vmem:[%s292 + $0x118] sm:$0xff]
      %v1348 = vld [vmem:[%s292 + $0x120] sm:$0xff]
      %v1349 = vld [vmem:[%s292 + $0x128] sm:$0xff]
      %v1350 = vld [vmem:[%s292 + $0x130] sm:$0xff]
      %v1351 = vld [vmem:[%s292 + $0x138] sm:$0xff]
      %v1352 = vld [vmem:[%s292 + $0x140] sm:$0xff]
      %v1353 = vld [vmem:[%s292 + $0x148] sm:$0xff]
      %vm1354 = vcmask 400384
      %v1355 = vsel %vm1354, %v1104, 0.0
      %1356 = vadd.xlane.f32.xlu0 %v1355
      %v1357 = vpop.xlane.xlu0 %1356
      %v1358 = vsel %vm1354, %v1107, 0.0
      %1359 = vadd.xlane.f32.xlu0 %v1358
      %v1360 = vpop.xlane.xlu0 %1359
      %v1361 = vsel %vm1354, %v1112, 0.0
      %1362 = vadd.xlane.f32.xlu0 %v1361
      %v1363 = vpop.xlane.xlu0 %1362
      %v1364 = vsel %vm1354, %v1115, 0.0
      %1365 = vadd.xlane.f32.xlu0 %v1364
      %v1366 = vpop.xlane.xlu0 %1365
      %v1367 = vsel %vm1354, %v1120, 0.0
      %1368 = vadd.xlane.f32.xlu0 %v1367
      %v1369 = vpop.xlane.xlu0 %1368
      %v1370 = vsel %vm1354, %v1123, 0.0
      %1371 = vadd.xlane.f32.xlu0 %v1370
      %v1372 = vpop.xlane.xlu0 %1371
      %v1373 = vsel %vm1354, %v1128, 0.0
      %1374 = vadd.xlane.f32.xlu0 %v1373
      %v1375 = vpop.xlane.xlu0 %1374
      %v1376 = vsel %vm1354, %v1131, 0.0
      %1377 = vadd.xlane.f32.xlu0 %v1376
      %v1378 = vpop.xlane.xlu0 %1377
      %v1379 = vsel %vm1354, %v1136, 0.0
      %1380 = vadd.xlane.f32.xlu0 %v1379
      %v1381 = vpop.xlane.xlu0 %1380
      %v1382 = vsel %vm1354, %v1139, 0.0
      %1383 = vadd.xlane.f32.xlu0 %v1382
      %v1384 = vpop.xlane.xlu0 %1383
      %v1385 = vsel %vm1354, %v1144, 0.0
      %1386 = vadd.xlane.f32.xlu0 %v1385
      %v1387 = vpop.xlane.xlu0 %1386
      %v1388 = vsel %vm1354, %v1147, 0.0
      %1389 = vadd.xlane.f32.xlu0 %v1388
      %v1390 = vpop.xlane.xlu0 %1389
      %v1391 = vsel %vm1354, %v1152, 0.0
      %1392 = vadd.xlane.f32.xlu0 %v1391
      %v1393 = vpop.xlane.xlu0 %1392
      %v1394 = vsel %vm1354, %v1155, 0.0
      %1395 = vadd.xlane.f32.xlu0 %v1394
      %v1396 = vpop.xlane.xlu0 %1395
      %v1397 = vsel %vm1354, %v1160, 0.0
      %1398 = vadd.xlane.f32.xlu0 %v1397
      %v1399 = vpop.xlane.xlu0 %1398
      %v1400 = vsel %vm1354, %v1163, 0.0
      %1401 = vadd.xlane.f32.xlu0 %v1400
      %v1402 = vpop.xlane.xlu0 %1401
      %v1403 = vsel %vm1354, %v1168, 0.0
      %1404 = vadd.xlane.f32.xlu0 %v1403
      %v1405 = vpop.xlane.xlu0 %1404
      %v1406 = vsel %vm1354, %v1171, 0.0
      %1407 = vadd.xlane.f32.xlu0 %v1406
      %v1408 = vpop.xlane.xlu0 %1407
      %v1409 = vsel %vm1354, %v1176, 0.0
      %1410 = vadd.xlane.f32.xlu0 %v1409
      %v1411 = vpop.xlane.xlu0 %1410
      %v1412 = vsel %vm1354, %v1179, 0.0
      %1413 = vadd.xlane.f32.xlu0 %v1412
      %v1414 = vpop.xlane.xlu0 %1413
      %v1415 = vsel %vm1354, %v1184, 0.0
      %1416 = vadd.xlane.f32.xlu0 %v1415
      %v1417 = vpop.xlane.xlu0 %1416
      %v1418 = vsel %vm1354, %v1187, 0.0
      %1419 = vadd.xlane.f32.xlu0 %v1418
      %v1420 = vpop.xlane.xlu0 %1419
      %v1421 = vsel %vm1354, %v1192, 0.0
      %1422 = vadd.xlane.f32.xlu0 %v1421
      %v1423 = vpop.xlane.xlu0 %1422
      %v1424 = vsel %vm1354, %v1195, 0.0
      %1425 = vadd.xlane.f32.xlu0 %v1424
      %v1426 = vpop.xlane.xlu0 %1425
      %v1427 = vsel %vm1354, %v1200, 0.0
      %1428 = vadd.xlane.f32.xlu0 %v1427
      %v1429 = vpop.xlane.xlu0 %1428
      %v1430 = vsel %vm1354, %v1203, 0.0
      %1431 = vadd.xlane.f32.xlu0 %v1430
      %v1432 = vpop.xlane.xlu0 %1431
      %v1433 = vsel %vm1354, %v1208, 0.0
      %1434 = vadd.xlane.f32.xlu0 %v1433
      %v1435 = vpop.xlane.xlu0 %1434
      %v1436 = vsel %vm1354, %v1211, 0.0
      %1437 = vadd.xlane.f32.xlu0 %v1436
      %v1438 = vpop.xlane.xlu0 %1437
      %v1439 = vsel %vm1354, %v1216, 0.0
      %1440 = vadd.xlane.f32.xlu0 %v1439
      %v1441 = vpop.xlane.xlu0 %1440
      %v1442 = vsel %vm1354, %v1219, 0.0
      %1443 = vadd.xlane.f32.xlu0 %v1442
      %v1444 = vpop.xlane.xlu0 %1443
      %v1445 = vsel %vm1354, %v1224, 0.0
      %1446 = vadd.xlane.f32.xlu0 %v1445
      %v1447 = vpop.xlane.xlu0 %1446
      %v1448 = vsel %vm1354, %v1227, 0.0
      %1449 = vadd.xlane.f32.xlu0 %v1448
      %v1450 = vpop.xlane.xlu0 %1449
      %v1451 = vsel %vm1354, %v1232, 0.0
      %1452 = vadd.xlane.f32.xlu0 %v1451
      %v1453 = vpop.xlane.xlu0 %1452
      %v1454 = vsel %vm1354, %v1235, 0.0
      %1455 = vadd.xlane.f32.xlu0 %v1454
      %v1456 = vpop.xlane.xlu0 %1455
      %v1457 = vsel %vm1354, %v1240, 0.0
      %1458 = vadd.xlane.f32.xlu0 %v1457
      %v1459 = vpop.xlane.xlu0 %1458
      %v1460 = vsel %vm1354, %v1243, 0.0
      %1461 = vadd.xlane.f32.xlu0 %v1460
      %v1462 = vpop.xlane.xlu0 %1461
      %v1463 = vsel %vm1354, %v1248, 0.0
      %1464 = vadd.xlane.f32.xlu0 %v1463
      %v1465 = vpop.xlane.xlu0 %1464
      %v1466 = vsel %vm1354, %v1251, 0.0
      %1467 = vadd.xlane.f32.xlu0 %v1466
      %v1468 = vpop.xlane.xlu0 %1467
      %v1469 = vsel %vm1354, %v1256, 0.0
      %1470 = vadd.xlane.f32.xlu0 %v1469
      %v1471 = vpop.xlane.xlu0 %1470
      %v1472 = vsel %vm1354, %v1259, 0.0
      %1473 = vadd.xlane.f32.xlu0 %v1472
      %v1474 = vpop.xlane.xlu0 %1473
      %v1475 = vsel %vm1354, %v1264, 0.0
      %1476 = vadd.xlane.f32.xlu0 %v1475
      %v1477 = vpop.xlane.xlu0 %1476
      %v1478 = vsel %vm1354, %v1267, 0.0
      %1479 = vadd.xlane.f32.xlu0 %v1478
      %v1480 = vpop.xlane.xlu0 %1479
      %v1481 = vadd.f32 %v1357, 0.0
      %v1482 = vadd.f32 %v1360, 0.0
      %v1483 = vadd.f32 %v1363, 0.0
      %v1484 = vadd.f32 %v1366, 0.0
      %v1485 = vadd.f32 %v1369, 0.0
      %v1486 = vadd.f32 %v1372, 0.0
      %v1487 = vadd.f32 %v1375, 0.0
      %v1488 = vadd.f32 %v1378, 0.0
      %v1489 = vadd.f32 %v1381, 0.0
      %v1490 = vadd.f32 %v1384, 0.0
      %v1491 = vadd.f32 %v1387, 0.0
      %v1492 = vadd.f32 %v1390, 0.0
      %v1493 = vadd.f32 %v1393, 0.0
      %v1494 = vadd.f32 %v1396, 0.0
      %v1495 = vadd.f32 %v1399, 0.0
      %v1496 = vadd.f32 %v1402, 0.0
      %v1497 = vadd.f32 %v1405, 0.0
      %v1498 = vadd.f32 %v1408, 0.0
      %v1499 = vadd.f32 %v1411, 0.0
      %v1500 = vadd.f32 %v1414, 0.0
      %v1501 = vadd.f32 %v1417, 0.0
      %v1502 = vadd.f32 %v1420, 0.0
      %v1503 = vadd.f32 %v1423, 0.0
      %v1504 = vadd.f32 %v1426, 0.0
      %v1505 = vadd.f32 %v1429, 0.0
      %v1506 = vadd.f32 %v1432, 0.0
      %v1507 = vadd.f32 %v1435, 0.0
      %v1508 = vadd.f32 %v1438, 0.0
      %v1509 = vadd.f32 %v1441, 0.0
      %v1510 = vadd.f32 %v1444, 0.0
      %v1511 = vadd.f32 %v1447, 0.0
      %v1512 = vadd.f32 %v1450, 0.0
      %v1513 = vadd.f32 %v1453, 0.0
      %v1514 = vadd.f32 %v1456, 0.0
      %v1515 = vadd.f32 %v1459, 0.0
      %v1516 = vadd.f32 %v1462, 0.0
      %v1517 = vadd.f32 %v1465, 0.0
      %v1518 = vadd.f32 %v1468, 0.0
      %v1519 = vadd.f32 %v1471, 0.0
      %v1520 = vadd.f32 %v1474, 0.0
      %v1521 = vadd.f32 %v1477, 0.0
      %v1522 = vadd.f32 %v1480, 0.0
      %v1523 = vmul.f32 %v1481, 0.020408163
      %v1524 = vmul.f32 %v1482, 0.020408163
      %v1525 = vmul.f32 %v1483, 0.020408163
      %v1526 = vmul.f32 %v1484, 0.020408163
      %v1527 = vmul.f32 %v1485, 0.020408163
      %v1528 = vmul.f32 %v1486, 0.020408163
      %v1529 = vmul.f32 %v1487, 0.020408163
      %v1530 = vmul.f32 %v1488, 0.020408163
      %v1531 = vmul.f32 %v1489, 0.020408163
      %v1532 = vmul.f32 %v1490, 0.020408163
      %v1533 = vmul.f32 %v1491, 0.020408163
      %v1534 = vmul.f32 %v1492, 0.020408163
      %v1535 = vmul.f32 %v1493, 0.020408163
      %v1536 = vmul.f32 %v1494, 0.020408163
      %v1537 = vmul.f32 %v1495, 0.020408163
      %v1538 = vmul.f32 %v1496, 0.020408163
      %v1539 = vmul.f32 %v1497, 0.020408163
      %v1540 = vmul.f32 %v1498, 0.020408163
      %v1541 = vmul.f32 %v1499, 0.020408163
      %v1542 = vmul.f32 %v1500, 0.020408163
      %v1543 = vmul.f32 %v1501, 0.020408163
      %v1544 = vmul.f32 %v1502, 0.020408163
      %v1545 = vmul.f32 %v1503, 0.020408163
      %v1546 = vmul.f32 %v1504, 0.020408163
      %v1547 = vmul.f32 %v1505, 0.020408163
      %v1548 = vmul.f32 %v1506, 0.020408163
      %v1549 = vmul.f32 %v1507, 0.020408163
      %v1550 = vmul.f32 %v1508, 0.020408163
      %v1551 = vmul.f32 %v1509, 0.020408163
      %v1552 = vmul.f32 %v1510, 0.020408163
      %v1553 = vmul.f32 %v1511, 0.020408163
      %v1554 = vmul.f32 %v1512, 0.020408163
      %v1555 = vmul.f32 %v1513, 0.020408163
      %v1556 = vmul.f32 %v1514, 0.020408163
      %v1557 = vmul.f32 %v1515, 0.020408163
      %v1558 = vmul.f32 %v1516, 0.020408163
      %v1559 = vmul.f32 %v1517, 0.020408163
      %v1560 = vmul.f32 %v1518, 0.020408163
      %v1561 = vmul.f32 %v1519, 0.020408163
      %v1562 = vmul.f32 %v1520, 0.020408163
      %v1563 = vmul.f32 %v1521, 0.020408163
      %v1564 = vmul.f32 %v1522, 0.020408163
      %v1565 = vsub.f32 %v1104, %v1523
      %v1566 = vsub.f32 %v1107, %v1524
      %v1567 = vsub.f32 %v1112, %v1525
      %v1568 = vsub.f32 %v1115, %v1526
      %v1569 = vsub.f32 %v1120, %v1527
      %v1570 = vsub.f32 %v1123, %v1528
      %v1571 = vsub.f32 %v1128, %v1529
      %v1572 = vsub.f32 %v1131, %v1530
      %v1573 = vsub.f32 %v1136, %v1531
      %v1574 = vsub.f32 %v1139, %v1532
      %v1575 = vsub.f32 %v1144, %v1533
      %v1576 = vsub.f32 %v1147, %v1534
      %v1577 = vsub.f32 %v1152, %v1535
      %v1578 = vsub.f32 %v1155, %v1536
      %v1579 = vsub.f32 %v1160, %v1537
      %v1580 = vsub.f32 %v1163, %v1538
      %v1581 = vsub.f32 %v1168, %v1539
      %v1582 = vsub.f32 %v1171, %v1540
      %v1583 = vsub.f32 %v1176, %v1541
      %v1584 = vsub.f32 %v1179, %v1542
      %v1585 = vsub.f32 %v1184, %v1543
      %v1586 = vsub.f32 %v1187, %v1544
      %v1587 = vsub.f32 %v1192, %v1545
      %v1588 = vsub.f32 %v1195, %v1546
      %v1589 = vsub.f32 %v1200, %v1547
      %v1590 = vsub.f32 %v1203, %v1548
      %v1591 = vsub.f32 %v1208, %v1549
      %v1592 = vsub.f32 %v1211, %v1550
      %v1593 = vsub.f32 %v1216, %v1551
      %v1594 = vsub.f32 %v1219, %v1552
      %v1595 = vsub.f32 %v1224, %v1553
      %v1596 = vsub.f32 %v1227, %v1554
      %v1597 = vsub.f32 %v1232, %v1555
      %v1598 = vsub.f32 %v1235, %v1556
      %v1599 = vsub.f32 %v1240, %v1557
      %v1600 = vsub.f32 %v1243, %v1558
      %v1601 = vsub.f32 %v1248, %v1559
      %v1602 = vsub.f32 %v1251, %v1560
      %v1603 = vsub.f32 %v1256, %v1561
      %v1604 = vsub.f32 %v1259, %v1562
      %v1605 = vsub.f32 %v1264, %v1563
      %v1606 = vsub.f32 %v1267, %v1564
      %v1607 = vmul.f32 %v1565, %v1565
      %v1608 = vmul.f32 %v1566, %v1566
      %v1609 = vmul.f32 %v1567, %v1567
      %v1610 = vmul.f32 %v1568, %v1568
      %v1611 = vmul.f32 %v1569, %v1569
      %v1612 = vmul.f32 %v1570, %v1570
      %v1613 = vmul.f32 %v1571, %v1571
      %v1614 = vmul.f32 %v1572, %v1572
      %v1615 = vmul.f32 %v1573, %v1573
      %v1616 = vmul.f32 %v1574, %v1574
      %v1617 = vmul.f32 %v1575, %v1575
      %v1618 = vmul.f32 %v1576, %v1576
      %v1619 = vmul.f32 %v1577, %v1577
      %v1620 = vmul.f32 %v1578, %v1578
      %v1621 = vmul.f32 %v1579, %v1579
      %v1622 = vmul.f32 %v1580, %v1580
      %v1623 = vmul.f32 %v1581, %v1581
      %v1624 = vmul.f32 %v1582, %v1582
      %v1625 = vmul.f32 %v1583, %v1583
      %v1626 = vmul.f32 %v1584, %v1584
      %v1627 = vmul.f32 %v1585, %v1585
      %v1628 = vmul.f32 %v1586, %v1586
      %v1629 = vmul.f32 %v1587, %v1587
      %v1630 = vmul.f32 %v1588, %v1588
      %v1631 = vmul.f32 %v1589, %v1589
      %v1632 = vmul.f32 %v1590, %v1590
      %v1633 = vmul.f32 %v1591, %v1591
      %v1634 = vmul.f32 %v1592, %v1592
      %v1635 = vmul.f32 %v1593, %v1593
      %v1636 = vmul.f32 %v1594, %v1594
      %v1637 = vmul.f32 %v1595, %v1595
      %v1638 = vmul.f32 %v1596, %v1596
      %v1639 = vmul.f32 %v1597, %v1597
      %v1640 = vmul.f32 %v1598, %v1598
      %v1641 = vmul.f32 %v1599, %v1599
      %v1642 = vmul.f32 %v1600, %v1600
      %v1643 = vmul.f32 %v1601, %v1601
      %v1644 = vmul.f32 %v1602, %v1602
      %v1645 = vmul.f32 %v1603, %v1603
      %v1646 = vmul.f32 %v1604, %v1604
      %v1647 = vmul.f32 %v1605, %v1605
      %v1648 = vmul.f32 %v1606, %v1606
      %v1649 = vsel %vm1354, %v1607, 0.0
      %1650 = vadd.xlane.f32.xlu0 %v1649
      %v1651 = vpop.xlane.xlu0 %1650
      %v1652 = vsel %vm1354, %v1608, 0.0
      %1653 = vadd.xlane.f32.xlu0 %v1652
      %v1654 = vpop.xlane.xlu0 %1653
      %v1655 = vsel %vm1354, %v1609, 0.0
      %1656 = vadd.xlane.f32.xlu0 %v1655
      %v1657 = vpop.xlane.xlu0 %1656
      %v1658 = vsel %vm1354, %v1610, 0.0
      %1659 = vadd.xlane.f32.xlu0 %v1658
      %v1660 = vpop.xlane.xlu0 %1659
      %v1661 = vsel %vm1354, %v1611, 0.0
      %1662 = vadd.xlane.f32.xlu0 %v1661
      %v1663 = vpop.xlane.xlu0 %1662
      %v1664 = vsel %vm1354, %v1612, 0.0
      %1665 = vadd.xlane.f32.xlu0 %v1664
      %v1666 = vpop.xlane.xlu0 %1665
      %v1667 = vsel %vm1354, %v1613, 0.0
      %1668 = vadd.xlane.f32.xlu0 %v1667
      %v1669 = vpop.xlane.xlu0 %1668
      %v1670 = vsel %vm1354, %v1614, 0.0
      %1671 = vadd.xlane.f32.xlu0 %v1670
      %v1672 = vpop.xlane.xlu0 %1671
      %v1673 = vsel %vm1354, %v1615, 0.0
      %1674 = vadd.xlane.f32.xlu0 %v1673
      %v1675 = vpop.xlane.xlu0 %1674
      %v1676 = vsel %vm1354, %v1616, 0.0
      %1677 = vadd.xlane.f32.xlu0 %v1676
      %v1678 = vpop.xlane.xlu0 %1677
      %v1679 = vsel %vm1354, %v1617, 0.0
      %1680 = vadd.xlane.f32.xlu0 %v1679
      %v1681 = vpop.xlane.xlu0 %1680
      %v1682 = vsel %vm1354, %v1618, 0.0
      %1683 = vadd.xlane.f32.xlu0 %v1682
      %v1684 = vpop.xlane.xlu0 %1683
      %v1685 = vsel %vm1354, %v1619, 0.0
      %1686 = vadd.xlane.f32.xlu0 %v1685
      %v1687 = vpop.xlane.xlu0 %1686
      %v1688 = vsel %vm1354, %v1620, 0.0
      %1689 = vadd.xlane.f32.xlu0 %v1688
      %v1690 = vpop.xlane.xlu0 %1689
      %v1691 = vsel %vm1354, %v1621, 0.0
      %1692 = vadd.xlane.f32.xlu0 %v1691
      %v1693 = vpop.xlane.xlu0 %1692
      %v1694 = vsel %vm1354, %v1622, 0.0
      %1695 = vadd.xlane.f32.xlu0 %v1694
      %v1696 = vpop.xlane.xlu0 %1695
      %v1697 = vsel %vm1354, %v1623, 0.0
      %1698 = vadd.xlane.f32.xlu0 %v1697
      %v1699 = vpop.xlane.xlu0 %1698
      %v1700 = vsel %vm1354, %v1624, 0.0
      %1701 = vadd.xlane.f32.xlu0 %v1700
      %v1702 = vpop.xlane.xlu0 %1701
      %v1703 = vsel %vm1354, %v1625, 0.0
      %1704 = vadd.xlane.f32.xlu0 %v1703
      %v1705 = vpop.xlane.xlu0 %1704
      %v1706 = vsel %vm1354, %v1626, 0.0
      %1707 = vadd.xlane.f32.xlu0 %v1706
      %v1708 = vpop.xlane.xlu0 %1707
      %v1709 = vsel %vm1354, %v1627, 0.0
      %1710 = vadd.xlane.f32.xlu0 %v1709
      %v1711 = vpop.xlane.xlu0 %1710
      %v1712 = vsel %vm1354, %v1628, 0.0
      %1713 = vadd.xlane.f32.xlu0 %v1712
      %v1714 = vpop.xlane.xlu0 %1713
      %v1715 = vsel %vm1354, %v1629, 0.0
      %1716 = vadd.xlane.f32.xlu0 %v1715
      %v1717 = vpop.xlane.xlu0 %1716
      %v1718 = vsel %vm1354, %v1630, 0.0
      %1719 = vadd.xlane.f32.xlu0 %v1718
      %v1720 = vpop.xlane.xlu0 %1719
      %v1721 = vsel %vm1354, %v1631, 0.0
      %1722 = vadd.xlane.f32.xlu0 %v1721
      %v1723 = vpop.xlane.xlu0 %1722
      %v1724 = vsel %vm1354, %v1632, 0.0
      %1725 = vadd.xlane.f32.xlu0 %v1724
      %v1726 = vpop.xlane.xlu0 %1725
      %v1727 = vsel %vm1354, %v1633, 0.0
      %1728 = vadd.xlane.f32.xlu0 %v1727
      %v1729 = vpop.xlane.xlu0 %1728
      %v1730 = vsel %vm1354, %v1634, 0.0
      %1731 = vadd.xlane.f32.xlu0 %v1730
      %v1732 = vpop.xlane.xlu0 %1731
      %v1733 = vsel %vm1354, %v1635, 0.0
      %1734 = vadd.xlane.f32.xlu0 %v1733
      %v1735 = vpop.xlane.xlu0 %1734
      %v1736 = vsel %vm1354, %v1636, 0.0
      %1737 = vadd.xlane.f32.xlu0 %v1736
      %v1738 = vpop.xlane.xlu0 %1737
      %v1739 = vsel %vm1354, %v1637, 0.0
      %1740 = vadd.xlane.f32.xlu0 %v1739
      %v1741 = vpop.xlane.xlu0 %1740
      %v1742 = vsel %vm1354, %v1638, 0.0
      %1743 = vadd.xlane.f32.xlu0 %v1742
      %v1744 = vpop.xlane.xlu0 %1743
      %v1745 = vsel %vm1354, %v1639, 0.0
      %1746 = vadd.xlane.f32.xlu0 %v1745
      %v1747 = vpop.xlane.xlu0 %1746
      %v1748 = vsel %vm1354, %v1640, 0.0
      %1749 = vadd.xlane.f32.xlu0 %v1748
      %v1750 = vpop.xlane.xlu0 %1749
      %v1751 = vsel %vm1354, %v1641, 0.0
      %1752 = vadd.xlane.f32.xlu0 %v1751
      %v1753 = vpop.xlane.xlu0 %1752
      %v1754 = vsel %vm1354, %v1642, 0.0
      %1755 = vadd.xlane.f32.xlu0 %v1754
      %v1756 = vpop.xlane.xlu0 %1755
      %v1757 = vsel %vm1354, %v1643, 0.0
      %1758 = vadd.xlane.f32.xlu0 %v1757
      %v1759 = vpop.xlane.xlu0 %1758
      %v1760 = vsel %vm1354, %v1644, 0.0
      %1761 = vadd.xlane.f32.xlu0 %v1760
      %v1762 = vpop.xlane.xlu0 %1761
      %v1763 = vsel %vm1354, %v1645, 0.0
      %1764 = vadd.xlane.f32.xlu0 %v1763
      %v1765 = vpop.xlane.xlu0 %1764
      %v1766 = vsel %vm1354, %v1646, 0.0
      %1767 = vadd.xlane.f32.xlu0 %v1766
      %v1768 = vpop.xlane.xlu0 %1767
      %v1769 = vsel %vm1354, %v1647, 0.0
      %1770 = vadd.xlane.f32.xlu0 %v1769
      %v1771 = vpop.xlane.xlu0 %1770
      %v1772 = vsel %vm1354, %v1648, 0.0
      %1773 = vadd.xlane.f32.xlu0 %v1772
      %v1774 = vpop.xlane.xlu0 %1773
      %v1775 = vadd.f32 %v1651, 0.0
      %v1776 = vadd.f32 %v1654, 0.0
      %v1777 = vadd.f32 %v1657, 0.0
      %v1778 = vadd.f32 %v1660, 0.0
      %v1779 = vadd.f32 %v1663, 0.0
      %v1780 = vadd.f32 %v1666, 0.0
      %v1781 = vadd.f32 %v1669, 0.0
      %v1782 = vadd.f32 %v1672, 0.0
      %v1783 = vadd.f32 %v1675, 0.0
      %v1784 = vadd.f32 %v1678, 0.0
      %v1785 = vadd.f32 %v1681, 0.0
      %v1786 = vadd.f32 %v1684, 0.0
      %v1787 = vadd.f32 %v1687, 0.0
      %v1788 = vadd.f32 %v1690, 0.0
      %v1789 = vadd.f32 %v1693, 0.0
      %v1790 = vadd.f32 %v1696, 0.0
      %v1791 = vadd.f32 %v1699, 0.0
      %v1792 = vadd.f32 %v1702, 0.0
      %v1793 = vadd.f32 %v1705, 0.0
      %v1794 = vadd.f32 %v1708, 0.0
      %v1795 = vadd.f32 %v1711, 0.0
      %v1796 = vadd.f32 %v1714, 0.0
      %v1797 = vadd.f32 %v1717, 0.0
      %v1798 = vadd.f32 %v1720, 0.0
      %v1799 = vadd.f32 %v1723, 0.0
      %v1800 = vadd.f32 %v1726, 0.0
      %v1801 = vadd.f32 %v1729, 0.0
      %v1802 = vadd.f32 %v1732, 0.0
      %v1803 = vadd.f32 %v1735, 0.0
      %v1804 = vadd.f32 %v1738, 0.0
      %v1805 = vadd.f32 %v1741, 0.0
      %v1806 = vadd.f32 %v1744, 0.0
      %v1807 = vadd.f32 %v1747, 0.0
      %v1808 = vadd.f32 %v1750, 0.0
      %v1809 = vadd.f32 %v1753, 0.0
      %v1810 = vadd.f32 %v1756, 0.0
      %v1811 = vadd.f32 %v1759, 0.0
      %v1812 = vadd.f32 %v1762, 0.0
      %v1813 = vadd.f32 %v1765, 0.0
      %v1814 = vadd.f32 %v1768, 0.0
      %v1815 = vadd.f32 %v1771, 0.0
      %v1816 = vadd.f32 %v1774, 0.0
      %v1817 = vmul.f32 %v1775, 0.020408163
      %v1818 = vmul.f32 %v1776, 0.020408163
      %v1819 = vmul.f32 %v1777, 0.020408163
      %v1820 = vmul.f32 %v1778, 0.020408163
      %v1821 = vmul.f32 %v1779, 0.020408163
      %v1822 = vmul.f32 %v1780, 0.020408163
      %v1823 = vmul.f32 %v1781, 0.020408163
      %v1824 = vmul.f32 %v1782, 0.020408163
      %v1825 = vmul.f32 %v1783, 0.020408163
      %v1826 = vmul.f32 %v1784, 0.020408163
      %v1827 = vmul.f32 %v1785, 0.020408163
      %v1828 = vmul.f32 %v1786, 0.020408163
      %v1829 = vmul.f32 %v1787, 0.020408163
      %v1830 = vmul.f32 %v1788, 0.020408163
      %v1831 = vmul.f32 %v1789, 0.020408163
      %v1832 = vmul.f32 %v1790, 0.020408163
      %v1833 = vmul.f32 %v1791, 0.020408163
      %v1834 = vmul.f32 %v1792, 0.020408163
      %v1835 = vmul.f32 %v1793, 0.020408163
      %v1836 = vmul.f32 %v1794, 0.020408163
      %v1837 = vmul.f32 %v1795, 0.020408163
      %v1838 = vmul.f32 %v1796, 0.020408163
      %v1839 = vmul.f32 %v1797, 0.020408163
      %v1840 = vmul.f32 %v1798, 0.020408163
      %v1841 = vmul.f32 %v1799, 0.020408163
      %v1842 = vmul.f32 %v1800, 0.020408163
      %v1843 = vmul.f32 %v1801, 0.020408163
      %v1844 = vmul.f32 %v1802, 0.020408163
      %v1845 = vmul.f32 %v1803, 0.020408163
      %v1846 = vmul.f32 %v1804, 0.020408163
      %v1847 = vmul.f32 %v1805, 0.020408163
      %v1848 = vmul.f32 %v1806, 0.020408163
      %v1849 = vmul.f32 %v1807, 0.020408163
      %v1850 = vmul.f32 %v1808, 0.020408163
      %v1851 = vmul.f32 %v1809, 0.020408163
      %v1852 = vmul.f32 %v1810, 0.020408163
      %v1853 = vmul.f32 %v1811, 0.020408163
      %v1854 = vmul.f32 %v1812, 0.020408163
      %v1855 = vmul.f32 %v1813, 0.020408163
      %v1856 = vmul.f32 %v1814, 0.020408163
      %v1857 = vmul.f32 %v1815, 0.020408163
      %v1858 = vmul.f32 %v1816, 0.020408163
      %v1859 = vadd.f32 %v1817, 1e-05
      %v1860 = vadd.f32 %v1818, 1e-05
      %v1861 = vadd.f32 %v1819, 1e-05
      %v1862 = vadd.f32 %v1820, 1e-05
      %v1863 = vadd.f32 %v1821, 1e-05
      %v1864 = vadd.f32 %v1822, 1e-05
      %v1865 = vadd.f32 %v1823, 1e-05
      %v1866 = vadd.f32 %v1824, 1e-05
      %v1867 = vadd.f32 %v1825, 1e-05
      %v1868 = vadd.f32 %v1826, 1e-05
      %v1869 = vadd.f32 %v1827, 1e-05
      %v1870 = vadd.f32 %v1828, 1e-05
      %v1871 = vadd.f32 %v1829, 1e-05
      %v1872 = vadd.f32 %v1830, 1e-05
      %v1873 = vadd.f32 %v1831, 1e-05
      %v1874 = vadd.f32 %v1832, 1e-05
      %v1875 = vadd.f32 %v1833, 1e-05
      %v1876 = vadd.f32 %v1834, 1e-05
      %v1877 = vadd.f32 %v1835, 1e-05
      %v1878 = vadd.f32 %v1836, 1e-05
      %v1879 = vadd.f32 %v1837, 1e-05
      %v1880 = vadd.f32 %v1838, 1e-05
      %v1881 = vadd.f32 %v1839, 1e-05
      %v1882 = vadd.f32 %v1840, 1e-05
      %v1883 = vadd.f32 %v1841, 1e-05
      %v1884 = vadd.f32 %v1842, 1e-05
      %v1885 = vadd.f32 %v1843, 1e-05
      %v1886 = vadd.f32 %v1844, 1e-05
      %v1887 = vadd.f32 %v1845, 1e-05
      %v1888 = vadd.f32 %v1846, 1e-05
      %v1889 = vadd.f32 %v1847, 1e-05
      %v1890 = vadd.f32 %v1848, 1e-05
      %v1891 = vadd.f32 %v1849, 1e-05
      %v1892 = vadd.f32 %v1850, 1e-05
      %v1893 = vadd.f32 %v1851, 1e-05
      %v1894 = vadd.f32 %v1852, 1e-05
      %v1895 = vadd.f32 %v1853, 1e-05
      %v1896 = vadd.f32 %v1854, 1e-05
      %v1897 = vadd.f32 %v1855, 1e-05
      %v1898 = vadd.f32 %v1856, 1e-05
      %v1899 = vadd.f32 %v1857, 1e-05
      %v1900 = vadd.f32 %v1858, 1e-05
      %v1901 = vrsqrt.pop %v1859
      %v1902 = vrsqrt.pop %v1860
      %v1903 = vrsqrt.pop %v1861
      %v1904 = vrsqrt.pop %v1862
      %v1905 = vrsqrt.pop %v1863
      %v1906 = vrsqrt.pop %v1864
      %v1907 = vrsqrt.pop %v1865
      %v1908 = vrsqrt.pop %v1866
      %v1909 = vrsqrt.pop %v1867
      %v1910 = vrsqrt.pop %v1868
      %v1911 = vrsqrt.pop %v1869
      %v1912 = vrsqrt.pop %v1870
      %v1913 = vrsqrt.pop %v1871
      %v1914 = vrsqrt.pop %v1872
      %v1915 = vrsqrt.pop %v1873
      %v1916 = vrsqrt.pop %v1874
      %v1917 = vrsqrt.pop %v1875
      %v1918 = vrsqrt.pop %v1876
      %v1919 = vrsqrt.pop %v1877
      %v1920 = vrsqrt.pop %v1878
      %v1921 = vrsqrt.pop %v1879
      %v1922 = vrsqrt.pop %v1880
      %v1923 = vrsqrt.pop %v1881
      %v1924 = vrsqrt.pop %v1882
      %v1925 = vrsqrt.pop %v1883
      %v1926 = vrsqrt.pop %v1884
      %v1927 = vrsqrt.pop %v1885
      %v1928 = vrsqrt.pop %v1886
      %v1929 = vrsqrt.pop %v1887
      %v1930 = vrsqrt.pop %v1888
      %v1931 = vrsqrt.pop %v1889
      %v1932 = vrsqrt.pop %v1890
      %v1933 = vrsqrt.pop %v1891
      %v1934 = vrsqrt.pop %v1892
      %v1935 = vrsqrt.pop %v1893
      %v1936 = vrsqrt.pop %v1894
      %v1937 = vrsqrt.pop %v1895
      %v1938 = vrsqrt.pop %v1896
      %v1939 = vrsqrt.pop %v1897
      %v1940 = vrsqrt.pop %v1898
      %v1941 = vrsqrt.pop %v1899
      %v1942 = vrsqrt.pop %v1900
      %v1943 = vmul.f32 %v1270, %v1901
      %v1944 = vmul.f32 %v1271, %v1902
      %v1945 = vmul.f32 %v1272, %v1903
      %v1946 = vmul.f32 %v1273, %v1904
      %v1947 = vmul.f32 %v1274, %v1905
      %v1948 = vmul.f32 %v1275, %v1906
      %v1949 = vmul.f32 %v1276, %v1907
      %v1950 = vmul.f32 %v1277, %v1908
      %v1951 = vmul.f32 %v1278, %v1909
      %v1952 = vmul.f32 %v1279, %v1910
      %v1953 = vmul.f32 %v1280, %v1911
      %v1954 = vmul.f32 %v1281, %v1912
      %v1955 = vmul.f32 %v1282, %v1913
      %v1956 = vmul.f32 %v1283, %v1914
      %v1957 = vmul.f32 %v1284, %v1915
      %v1958 = vmul.f32 %v1285, %v1916
      %v1959 = vmul.f32 %v1286, %v1917
      %v1960 = vmul.f32 %v1287, %v1918
      %v1961 = vmul.f32 %v1288, %v1919
      %v1962 = vmul.f32 %v1289, %v1920
      %v1963 = vmul.f32 %v1290, %v1921
      %v1964 = vmul.f32 %v1291, %v1922
      %v1965 = vmul.f32 %v1292, %v1923
      %v1966 = vmul.f32 %v1293, %v1924
      %v1967 = vmul.f32 %v1294, %v1925
      %v1968 = vmul.f32 %v1295, %v1926
      %v1969 = vmul.f32 %v1296, %v1927
      %v1970 = vmul.f32 %v1297, %v1928
      %v1971 = vmul.f32 %v1298, %v1929
      %v1972 = vmul.f32 %v1299, %v1930
      %v1973 = vmul.f32 %v1300, %v1931
      %v1974 = vmul.f32 %v1301, %v1932
      %v1975 = vmul.f32 %v1302, %v1933
      %v1976 = vmul.f32 %v1303, %v1934
      %v1977 = vmul.f32 %v1304, %v1935
      %v1978 = vmul.f32 %v1305, %v1936
      %v1979 = vmul.f32 %v1306, %v1937
      %v1980 = vmul.f32 %v1307, %v1938
      %v1981 = vmul.f32 %v1308, %v1939
      %v1982 = vmul.f32 %v1309, %v1940
      %v1983 = vmul.f32 %v1310, %v1941
      %v1984 = vmul.f32 %v1311, %v1942
      %1986 = vset.pattern.permute.xlu0 0
      %1987 = vperm.xlu0 %1986, %v1943
      %v1988 = vpop.permute.xlu0 %1987
      %1991 = vset.pattern.permute.xlu0 0
      %1992 = vperm.xlu0 %1991, %v1944
      %v1993 = vpop.permute.xlu0 %1992
      %1996 = vset.pattern.permute.xlu0 0
      %1997 = vperm.xlu0 %1996, %v1945
      %v1998 = vpop.permute.xlu0 %1997
      %2001 = vset.pattern.permute.xlu0 0
      %2002 = vperm.xlu0 %2001, %v1946
      %v2003 = vpop.permute.xlu0 %2002
      %2006 = vset.pattern.permute.xlu0 0
      %2007 = vperm.xlu0 %2006, %v1947
      %v2008 = vpop.permute.xlu0 %2007
      %2011 = vset.pattern.permute.xlu0 0
      %2012 = vperm.xlu0 %2011, %v1948
      %v2013 = vpop.permute.xlu0 %2012
      %2016 = vset.pattern.permute.xlu0 0
      %2017 = vperm.xlu0 %2016, %v1949
      %v2018 = vpop.permute.xlu0 %2017
      %2021 = vset.pattern.permute.xlu0 0
      %2022 = vperm.xlu0 %2021, %v1950
      %v2023 = vpop.permute.xlu0 %2022
      %2026 = vset.pattern.permute.xlu0 0
      %2027 = vperm.xlu0 %2026, %v1951
      %v2028 = vpop.permute.xlu0 %2027
      %2031 = vset.pattern.permute.xlu0 0
      %2032 = vperm.xlu0 %2031, %v1952
      %v2033 = vpop.permute.xlu0 %2032
      %2036 = vset.pattern.permute.xlu0 0
      %2037 = vperm.xlu0 %2036, %v1953
      %v2038 = vpop.permute.xlu0 %2037
      %2041 = vset.pattern.permute.xlu0 0
      %2042 = vperm.xlu0 %2041, %v1954
      %v2043 = vpop.permute.xlu0 %2042
      %2046 = vset.pattern.permute.xlu0 0
      %2047 = vperm.xlu0 %2046, %v1955
      %v2048 = vpop.permute.xlu0 %2047
      %2051 = vset.pattern.permute.xlu0 0
      %2052 = vperm.xlu0 %2051, %v1956
      %v2053 = vpop.permute.xlu0 %2052
      %2056 = vset.pattern.permute.xlu0 0
      %2057 = vperm.xlu0 %2056, %v1957
      %v2058 = vpop.permute.xlu0 %2057
      %2061 = vset.pattern.permute.xlu0 0
      %2062 = vperm.xlu0 %2061, %v1958
      %v2063 = vpop.permute.xlu0 %2062
      %2066 = vset.pattern.permute.xlu0 0
      %2067 = vperm.xlu0 %2066, %v1959
      %v2068 = vpop.permute.xlu0 %2067
      %2071 = vset.pattern.permute.xlu0 0
      %2072 = vperm.xlu0 %2071, %v1960
      %v2073 = vpop.permute.xlu0 %2072
      %2076 = vset.pattern.permute.xlu0 0
      %2077 = vperm.xlu0 %2076, %v1961
      %v2078 = vpop.permute.xlu0 %2077
      %2081 = vset.pattern.permute.xlu0 0
      %2082 = vperm.xlu0 %2081, %v1962
      %v2083 = vpop.permute.xlu0 %2082
      %2086 = vset.pattern.permute.xlu0 0
      %2087 = vperm.xlu0 %2086, %v1963
      %v2088 = vpop.permute.xlu0 %2087
      %2091 = vset.pattern.permute.xlu0 0
      %2092 = vperm.xlu0 %2091, %v1964
      %v2093 = vpop.permute.xlu0 %2092
      %2096 = vset.pattern.permute.xlu0 0
      %2097 = vperm.xlu0 %2096, %v1965
      %v2098 = vpop.permute.xlu0 %2097
      %2101 = vset.pattern.permute.xlu0 0
      %2102 = vperm.xlu0 %2101, %v1966
      %v2103 = vpop.permute.xlu0 %2102
      %2106 = vset.pattern.permute.xlu0 0
      %2107 = vperm.xlu0 %2106, %v1967
      %v2108 = vpop.permute.xlu0 %2107
      %2111 = vset.pattern.permute.xlu0 0
      %2112 = vperm.xlu0 %2111, %v1968
      %v2113 = vpop.permute.xlu0 %2112
      %2116 = vset.pattern.permute.xlu0 0
      %2117 = vperm.xlu0 %2116, %v1969
      %v2118 = vpop.permute.xlu0 %2117
      %2121 = vset.pattern.permute.xlu0 0
      %2122 = vperm.xlu0 %2121, %v1970
      %v2123 = vpop.permute.xlu0 %2122
      %2126 = vset.pattern.permute.xlu0 0
      %2127 = vperm.xlu0 %2126, %v1971
      %v2128 = vpop.permute.xlu0 %2127
      %2131 = vset.pattern.permute.xlu0 0
      %2132 = vperm.xlu0 %2131, %v1972
      %v2133 = vpop.permute.xlu0 %2132
      %2136 = vset.pattern.permute.xlu0 0
      %2137 = vperm.xlu0 %2136, %v1973
      %v2138 = vpop.permute.xlu0 %2137
      %2141 = vset.pattern.permute.xlu0 0
      %2142 = vperm.xlu0 %2141, %v1974
      %v2143 = vpop.permute.xlu0 %2142
      %2146 = vset.pattern.permute.xlu0 0
      %2147 = vperm.xlu0 %2146, %v1975
      %v2148 = vpop.permute.xlu0 %2147
      %2151 = vset.pattern.permute.xlu0 0
      %2152 = vperm.xlu0 %2151, %v1976
      %v2153 = vpop.permute.xlu0 %2152
      %2156 = vset.pattern.permute.xlu0 0
      %2157 = vperm.xlu0 %2156, %v1977
      %v2158 = vpop.permute.xlu0 %2157
      %2161 = vset.pattern.permute.xlu0 0
      %2162 = vperm.xlu0 %2161, %v1978
      %v2163 = vpop.permute.xlu0 %2162
      %2166 = vset.pattern.permute.xlu0 0
      %2167 = vperm.xlu0 %2166, %v1979
      %v2168 = vpop.permute.xlu0 %2167
      %2171 = vset.pattern.permute.xlu0 0
      %2172 = vperm.xlu0 %2171, %v1980
      %v2173 = vpop.permute.xlu0 %2172
      %2176 = vset.pattern.permute.xlu0 0
      %2177 = vperm.xlu0 %2176, %v1981
      %v2178 = vpop.permute.xlu0 %2177
      %2181 = vset.pattern.permute.xlu0 0
      %2182 = vperm.xlu0 %2181, %v1982
      %v2183 = vpop.permute.xlu0 %2182
      %2186 = vset.pattern.permute.xlu0 0
      %2187 = vperm.xlu0 %2186, %v1983
      %v2188 = vpop.permute.xlu0 %2187
      %2191 = vset.pattern.permute.xlu0 0
      %2192 = vperm.xlu0 %2191, %v1984
      %v2193 = vpop.permute.xlu0 %2192
      %v2195 = vmul.f32 %v1565, %v1988
      %v2196 = vmul.f32 %v1566, %v1993
      %v2197 = vmul.f32 %v1567, %v1998
      %v2198 = vmul.f32 %v1568, %v2003
      %v2199 = vmul.f32 %v1569, %v2008
      %v2200 = vmul.f32 %v1570, %v2013
      %v2201 = vmul.f32 %v1571, %v2018
      %v2202 = vmul.f32 %v1572, %v2023
      %v2203 = vmul.f32 %v1573, %v2028
      %v2204 = vmul.f32 %v1574, %v2033
      %v2205 = vmul.f32 %v1575, %v2038
      %v2206 = vmul.f32 %v1576, %v2043
      %v2207 = vmul.f32 %v1577, %v2048
      %v2208 = vmul.f32 %v1578, %v2053
      %v2209 = vmul.f32 %v1579, %v2058
      %v2210 = vmul.f32 %v1580, %v2063
      %v2211 = vmul.f32 %v1581, %v2068
      %v2212 = vmul.f32 %v1582, %v2073
      %v2213 = vmul.f32 %v1583, %v2078
      %v2214 = vmul.f32 %v1584, %v2083
      %v2215 = vmul.f32 %v1585, %v2088
      %v2216 = vmul.f32 %v1586, %v2093
      %v2217 = vmul.f32 %v1587, %v2098
      %v2218 = vmul.f32 %v1588, %v2103
      %v2219 = vmul.f32 %v1589, %v2108
      %v2220 = vmul.f32 %v1590, %v2113
      %v2221 = vmul.f32 %v1591, %v2118
      %v2222 = vmul.f32 %v1592, %v2123
      %v2223 = vmul.f32 %v1593, %v2128
      %v2224 = vmul.f32 %v1594, %v2133
      %v2225 = vmul.f32 %v1595, %v2138
      %v2226 = vmul.f32 %v1596, %v2143
      %v2227 = vmul.f32 %v1597, %v2148
      %v2228 = vmul.f32 %v1598, %v2153
      %v2229 = vmul.f32 %v1599, %v2158
      %v2230 = vmul.f32 %v1600, %v2163
      %v2231 = vmul.f32 %v1601, %v2168
      %v2232 = vmul.f32 %v1602, %v2173
      %v2233 = vmul.f32 %v1603, %v2178
      %v2234 = vmul.f32 %v1604, %v2183
      %v2235 = vmul.f32 %v1605, %v2188
      %v2236 = vmul.f32 %v1606, %v2193
      %2238 = vset.pattern.permute.xlu0 0
      %2239 = vperm.xlu0 %2238, %v1312
      %v2240 = vpop.permute.xlu0 %2239
      %2243 = vset.pattern.permute.xlu0 0
      %2244 = vperm.xlu0 %2243, %v1313
      %v2245 = vpop.permute.xlu0 %2244
      %2248 = vset.pattern.permute.xlu0 0
      %2249 = vperm.xlu0 %2248, %v1314
      %v2250 = vpop.permute.xlu0 %2249
      %2253 = vset.pattern.permute.xlu0 0
      %2254 = vperm.xlu0 %2253, %v1315
      %v2255 = vpop.permute.xlu0 %2254
      %2258 = vset.pattern.permute.xlu0 0
      %2259 = vperm.xlu0 %2258, %v1316
      %v2260 = vpop.permute.xlu0 %2259
      %2263 = vset.pattern.permute.xlu0 0
      %2264 = vperm.xlu0 %2263, %v1317
      %v2265 = vpop.permute.xlu0 %2264
      %2268 = vset.pattern.permute.xlu0 0
      %2269 = vperm.xlu0 %2268, %v1318
      %v2270 = vpop.permute.xlu0 %2269
      %2273 = vset.pattern.permute.xlu0 0
      %2274 = vperm.xlu0 %2273, %v1319
      %v2275 = vpop.permute.xlu0 %2274
      %2278 = vset.pattern.permute.xlu0 0
      %2279 = vperm.xlu0 %2278, %v1320
      %v2280 = vpop.permute.xlu0 %2279
      %2283 = vset.pattern.permute.xlu0 0
      %2284 = vperm.xlu0 %2283, %v1321
      %v2285 = vpop.permute.xlu0 %2284
      %2288 = vset.pattern.permute.xlu0 0
      %2289 = vperm.xlu0 %2288, %v1322
      %v2290 = vpop.permute.xlu0 %2289
      %2293 = vset.pattern.permute.xlu0 0
      %2294 = vperm.xlu0 %2293, %v1323
      %v2295 = vpop.permute.xlu0 %2294
      %2298 = vset.pattern.permute.xlu0 0
      %2299 = vperm.xlu0 %2298, %v1324
      %v2300 = vpop.permute.xlu0 %2299
      %2303 = vset.pattern.permute.xlu0 0
      %2304 = vperm.xlu0 %2303, %v1325
      %v2305 = vpop.permute.xlu0 %2304
      %2308 = vset.pattern.permute.xlu0 0
      %2309 = vperm.xlu0 %2308, %v1326
      %v2310 = vpop.permute.xlu0 %2309
      %2313 = vset.pattern.permute.xlu0 0
      %2314 = vperm.xlu0 %2313, %v1327
      %v2315 = vpop.permute.xlu0 %2314
      %2318 = vset.pattern.permute.xlu0 0
      %2319 = vperm.xlu0 %2318, %v1328
      %v2320 = vpop.permute.xlu0 %2319
      %2323 = vset.pattern.permute.xlu0 0
      %2324 = vperm.xlu0 %2323, %v1329
      %v2325 = vpop.permute.xlu0 %2324
      %2328 = vset.pattern.permute.xlu0 0
      %2329 = vperm.xlu0 %2328, %v1330
      %v2330 = vpop.permute.xlu0 %2329
      %2333 = vset.pattern.permute.xlu0 0
      %2334 = vperm.xlu0 %2333, %v1331
      %v2335 = vpop.permute.xlu0 %2334
      %2338 = vset.pattern.permute.xlu0 0
      %2339 = vperm.xlu0 %2338, %v1332
      %v2340 = vpop.permute.xlu0 %2339
      %2343 = vset.pattern.permute.xlu0 0
      %2344 = vperm.xlu0 %2343, %v1333
      %v2345 = vpop.permute.xlu0 %2344
      %2348 = vset.pattern.permute.xlu0 0
      %2349 = vperm.xlu0 %2348, %v1334
      %v2350 = vpop.permute.xlu0 %2349
      %2353 = vset.pattern.permute.xlu0 0
      %2354 = vperm.xlu0 %2353, %v1335
      %v2355 = vpop.permute.xlu0 %2354
      %2358 = vset.pattern.permute.xlu0 0
      %2359 = vperm.xlu0 %2358, %v1336
      %v2360 = vpop.permute.xlu0 %2359
      %2363 = vset.pattern.permute.xlu0 0
      %2364 = vperm.xlu0 %2363, %v1337
      %v2365 = vpop.permute.xlu0 %2364
      %2368 = vset.pattern.permute.xlu0 0
      %2369 = vperm.xlu0 %2368, %v1338
      %v2370 = vpop.permute.xlu0 %2369
      %2373 = vset.pattern.permute.xlu0 0
      %2374 = vperm.xlu0 %2373, %v1339
      %v2375 = vpop.permute.xlu0 %2374
      %2378 = vset.pattern.permute.xlu0 0
      %2379 = vperm.xlu0 %2378, %v1340
      %v2380 = vpop.permute.xlu0 %2379
      %2383 = vset.pattern.permute.xlu0 0
      %2384 = vperm.xlu0 %2383, %v1341
      %v2385 = vpop.permute.xlu0 %2384
      %2388 = vset.pattern.permute.xlu0 0
      %2389 = vperm.xlu0 %2388, %v1342
      %v2390 = vpop.permute.xlu0 %2389
      %2393 = vset.pattern.permute.xlu0 0
      %2394 = vperm.xlu0 %2393, %v1343
      %v2395 = vpop.permute.xlu0 %2394
      %2398 = vset.pattern.permute.xlu0 0
      %2399 = vperm.xlu0 %2398, %v1344
      %v2400 = vpop.permute.xlu0 %2399
      %2403 = vset.pattern.permute.xlu0 0
      %2404 = vperm.xlu0 %2403, %v1345
      %v2405 = vpop.permute.xlu0 %2404
      %2408 = vset.pattern.permute.xlu0 0
      %2409 = vperm.xlu0 %2408, %v1346
      %v2410 = vpop.permute.xlu0 %2409
      %2413 = vset.pattern.permute.xlu0 0
      %2414 = vperm.xlu0 %2413, %v1347
      %v2415 = vpop.permute.xlu0 %2414
      %2418 = vset.pattern.permute.xlu0 0
      %2419 = vperm.xlu0 %2418, %v1348
      %v2420 = vpop.permute.xlu0 %2419
      %2423 = vset.pattern.permute.xlu0 0
      %2424 = vperm.xlu0 %2423, %v1349
      %v2425 = vpop.permute.xlu0 %2424
      %2428 = vset.pattern.permute.xlu0 0
      %2429 = vperm.xlu0 %2428, %v1350
      %v2430 = vpop.permute.xlu0 %2429
      %2433 = vset.pattern.permute.xlu0 0
      %2434 = vperm.xlu0 %2433, %v1351
      %v2435 = vpop.permute.xlu0 %2434
      %2438 = vset.pattern.permute.xlu0 0
      %2439 = vperm.xlu0 %2438, %v1352
      %v2440 = vpop.permute.xlu0 %2439
      %2443 = vset.pattern.permute.xlu0 0
      %2444 = vperm.xlu0 %2443, %v1353
      %v2445 = vpop.permute.xlu0 %2444
      %v2447 = vadd.f32 %v2195, %v2240
      %v2448 = vadd.f32 %v2196, %v2245
      %v2449 = vadd.f32 %v2197, %v2250
      %v2450 = vadd.f32 %v2198, %v2255
      %v2451 = vadd.f32 %v2199, %v2260
      %v2452 = vadd.f32 %v2200, %v2265
      %v2453 = vadd.f32 %v2201, %v2270
      %v2454 = vadd.f32 %v2202, %v2275
      %v2455 = vadd.f32 %v2203, %v2280
      %v2456 = vadd.f32 %v2204, %v2285
      %v2457 = vadd.f32 %v2205, %v2290
      %v2458 = vadd.f32 %v2206, %v2295
      %v2459 = vadd.f32 %v2207, %v2300
      %v2460 = vadd.f32 %v2208, %v2305
      %v2461 = vadd.f32 %v2209, %v2310
      %v2462 = vadd.f32 %v2210, %v2315
      %v2463 = vadd.f32 %v2211, %v2320
      %v2464 = vadd.f32 %v2212, %v2325
      %v2465 = vadd.f32 %v2213, %v2330
      %v2466 = vadd.f32 %v2214, %v2335
      %v2467 = vadd.f32 %v2215, %v2340
      %v2468 = vadd.f32 %v2216, %v2345
      %v2469 = vadd.f32 %v2217, %v2350
      %v2470 = vadd.f32 %v2218, %v2355
      %v2471 = vadd.f32 %v2219, %v2360
      %v2472 = vadd.f32 %v2220, %v2365
      %v2473 = vadd.f32 %v2221, %v2370
      %v2474 = vadd.f32 %v2222, %v2375
      %v2475 = vadd.f32 %v2223, %v2380
      %v2476 = vadd.f32 %v2224, %v2385
      %v2477 = vadd.f32 %v2225, %v2390
      %v2478 = vadd.f32 %v2226, %v2395
      %v2479 = vadd.f32 %v2227, %v2400
      %v2480 = vadd.f32 %v2228, %v2405
      %v2481 = vadd.f32 %v2229, %v2410
      %v2482 = vadd.f32 %v2230, %v2415
      %v2483 = vadd.f32 %v2231, %v2420
      %v2484 = vadd.f32 %v2232, %v2425
      %v2485 = vadd.f32 %v2233, %v2430
      %v2486 = vadd.f32 %v2234, %v2435
      %v2487 = vadd.f32 %v2235, %v2440
      %v2488 = vadd.f32 %v2236, %v2445
      %2489 = vst.msk [vmem:[%s298] sm:$0xff] %vm1354, %v2447
      %2490 = vst.msk [vmem:[%s298 + $0x8] sm:$0xff] %vm1354, %v2448
      %2491 = vst.msk [vmem:[%s298 + $0x10] sm:$0xff] %vm1354, %v2449
      %2492 = vst.msk [vmem:[%s298 + $0x18] sm:$0xff] %vm1354, %v2450
      %2493 = vst.msk [vmem:[%s298 + $0x20] sm:$0xff] %vm1354, %v2451
      %2494 = vst.msk [vmem:[%s298 + $0x28] sm:$0xff] %vm1354, %v2452
      %2495 = vst.msk [vmem:[%s298 + $0x30] sm:$0xff] %vm1354, %v2453
      %2496 = vst.msk [vmem:[%s298 + $0x38] sm:$0xff] %vm1354, %v2454
      %2497 = vst.msk [vmem:[%s298 + $0x40] sm:$0xff] %vm1354, %v2455
      %2498 = vst.msk [vmem:[%s298 + $0x48] sm:$0xff] %vm1354, %v2456
      %2499 = vst.msk [vmem:[%s298 + $0x50] sm:$0xff] %vm1354, %v2457
      %2500 = vst.msk [vmem:[%s298 + $0x58] sm:$0xff] %vm1354, %v2458
      %2501 = vst.msk [vmem:[%s298 + $0x60] sm:$0xff] %vm1354, %v2459
      %2502 = vst.msk [vmem:[%s298 + $0x68] sm:$0xff] %vm1354, %v2460
      %2503 = vst.msk [vmem:[%s298 + $0x70] sm:$0xff] %vm1354, %v2461
      %2504 = vst.msk [vmem:[%s298 + $0x78] sm:$0xff] %vm1354, %v2462
      %2505 = vst.msk [vmem:[%s298 + $0x80] sm:$0xff] %vm1354, %v2463
      %2506 = vst.msk [vmem:[%s298 + $0x88] sm:$0xff] %vm1354, %v2464
      %2507 = vst.msk [vmem:[%s298 + $0x90] sm:$0xff] %vm1354, %v2465
      %2508 = vst.msk [vmem:[%s298 + $0x98] sm:$0xff] %vm1354, %v2466
      %2509 = vst.msk [vmem:[%s298 + $0xa0] sm:$0xff] %vm1354, %v2467
      %2510 = vst.msk [vmem:[%s298 + $0xa8] sm:$0xff] %vm1354, %v2468
      %2511 = vst.msk [vmem:[%s298 + $0xb0] sm:$0xff] %vm1354, %v2469
      %2512 = vst.msk [vmem:[%s298 + $0xb8] sm:$0xff] %vm1354, %v2470
      %2513 = vst.msk [vmem:[%s298 + $0xc0] sm:$0xff] %vm1354, %v2471
      %2514 = vst.msk [vmem:[%s298 + $0xc8] sm:$0xff] %vm1354, %v2472
      %2515 = vst.msk [vmem:[%s298 + $0xd0] sm:$0xff] %vm1354, %v2473
      %2516 = vst.msk [vmem:[%s298 + $0xd8] sm:$0xff] %vm1354, %v2474
      %2517 = vst.msk [vmem:[%s298 + $0xe0] sm:$0xff] %vm1354, %v2475
      %2518 = vst.msk [vmem:[%s298 + $0xe8] sm:$0xff] %vm1354, %v2476
      %2519 = vst.msk [vmem:[%s298 + $0xf0] sm:$0xff] %vm1354, %v2477
      %2520 = vst.msk [vmem:[%s298 + $0xf8] sm:$0xff] %vm1354, %v2478
      %2521 = vst.msk [vmem:[%s298 + $0x100] sm:$0xff] %vm1354, %v2479
      %2522 = vst.msk [vmem:[%s298 + $0x108] sm:$0xff] %vm1354, %v2480
      %2523 = vst.msk [vmem:[%s298 + $0x110] sm:$0xff] %vm1354, %v2481
      %2524 = vst.msk [vmem:[%s298 + $0x118] sm:$0xff] %vm1354, %v2482
      %2525 = vst.msk [vmem:[%s298 + $0x120] sm:$0xff] %vm1354, %v2483
      %2526 = vst.msk [vmem:[%s298 + $0x128] sm:$0xff] %vm1354, %v2484
      %2527 = vst.msk [vmem:[%s298 + $0x130] sm:$0xff] %vm1354, %v2485
      %2528 = vst.msk [vmem:[%s298 + $0x138] sm:$0xff] %vm1354, %v2486
      %2529 = vst.msk [vmem:[%s298 + $0x140] sm:$0xff] %vm1354, %v2487
      %2530 = vst.msk [vmem:[%s298 + $0x148] sm:$0xff] %vm1354, %v2488
      %p2531 = scmp.eq.s32.totalorder %s16, 1
      // Predicated region
      $region41: #{avgpool_cat_batchnorm.1} parent=39 // pred_check
        %p2532 = pneg %p2531
      $region42: #{avgpool_cat_batchnorm.1} parent=39 // pred_check_branch
        %2534 = sbr.rel (%p2532) target = $region44
      $region43: #{avgpool_cat_batchnorm.1} parent=39 // pred_region
        %v2535 = vld [vmem:[%s2] sm:$0xff]
        %v2536 = vld [vmem:[%s2 + $0x8] sm:$0xff]
        %v2537 = vld [vmem:[%s2 + $0x10] sm:$0xff]
        %v2538 = vld [vmem:[%s2 + $0x18] sm:$0xff]
        %v2539 = vld [vmem:[%s286 + $0x130] sm:$0xff]
        %v2540 = vld [vmem:[%s286 + $0x138] sm:$0xff]
        %v2541 = vld [vmem:[%s286 + $0x140] sm:$0xff]
        %v2542 = vld [vmem:[%s286 + $0x148] sm:$0xff]
        %v2543 = vld [vmem:[%s292 + $0x130] sm:$0xff]
        %v2544 = vld [vmem:[%s292 + $0x138] sm:$0xff]
        %v2545 = vld [vmem:[%s292 + $0x140] sm:$0xff]
        %v2546 = vld [vmem:[%s292 + $0x148] sm:$0xff]
        %v2547 = vsel %vm1354, %v2535, 0.0
        %2548 = vadd.xlane.f32.xlu0 %v2547
        %v2549 = vpop.xlane.xlu0 %2548
        %v2550 = vsel %vm1354, %v2536, 0.0
        %2551 = vadd.xlane.f32.xlu0 %v2550
        %v2552 = vpop.xlane.xlu0 %2551
        %v2553 = vsel %vm1354, %v2537, 0.0
        %2554 = vadd.xlane.f32.xlu0 %v2553
        %v2555 = vpop.xlane.xlu0 %2554
        %v2556 = vsel %vm1354, %v2538, 0.0
        %2557 = vadd.xlane.f32.xlu0 %v2556
        %v2558 = vpop.xlane.xlu0 %2557
        %v2559 = vadd.f32 %v2549, 0.0
        %v2560 = vadd.f32 %v2552, 0.0
        %v2561 = vadd.f32 %v2555, 0.0
        %v2562 = vadd.f32 %v2558, 0.0
        %v2563 = vmul.f32 %v2559, 0.020408163
        %v2564 = vmul.f32 %v2560, 0.020408163
        %v2565 = vmul.f32 %v2561, 0.020408163
        %v2566 = vmul.f32 %v2562, 0.020408163
        %v2567 = vsub.f32 %v2535, %v2563
        %v2568 = vsub.f32 %v2536, %v2564
        %v2569 = vsub.f32 %v2537, %v2565
        %v2570 = vsub.f32 %v2538, %v2566
        %v2571 = vmul.f32 %v2567, %v2567
        %v2572 = vmul.f32 %v2568, %v2568
        %v2573 = vmul.f32 %v2569, %v2569
        %v2574 = vmul.f32 %v2570, %v2570
        %v2575 = vsel %vm1354, %v2571, 0.0
        %2576 = vadd.xlane.f32.xlu0 %v2575
        %v2577 = vpop.xlane.xlu0 %2576
        %v2578 = vsel %vm1354, %v2572, 0.0
        %2579 = vadd.xlane.f32.xlu0 %v2578
        %v2580 = vpop.xlane.xlu0 %2579
        %v2581 = vsel %vm1354, %v2573, 0.0
        %2582 = vadd.xlane.f32.xlu0 %v2581
        %v2583 = vpop.xlane.xlu0 %2582
        %v2584 = vsel %vm1354, %v2574, 0.0
        %2585 = vadd.xlane.f32.xlu0 %v2584
        %v2586 = vpop.xlane.xlu0 %2585
        %v2587 = vadd.f32 %v2577, 0.0
        %v2588 = vadd.f32 %v2580, 0.0
        %v2589 = vadd.f32 %v2583, 0.0
        %v2590 = vadd.f32 %v2586, 0.0
        %v2591 = vmul.f32 %v2587, 0.020408163
        %v2592 = vmul.f32 %v2588, 0.020408163
        %v2593 = vmul.f32 %v2589, 0.020408163
        %v2594 = vmul.f32 %v2590, 0.020408163
        %v2595 = vadd.f32 %v2591, 1e-05
        %v2596 = vadd.f32 %v2592, 1e-05
        %v2597 = vadd.f32 %v2593, 1e-05
        %v2598 = vadd.f32 %v2594, 1e-05
        %v2599 = vrsqrt.pop %v2595
        %v2600 = vrsqrt.pop %v2596
        %v2601 = vrsqrt.pop %v2597
        %v2602 = vrsqrt.pop %v2598
        %v2603 = vmul.f32 %v2539, %v2599
        %v2604 = vmul.f32 %v2540, %v2600
        %v2605 = vmul.f32 %v2541, %v2601
        %v2606 = vmul.f32 %v2542, %v2602
        %2608 = vset.pattern.permute.xlu0 0
        %2609 = vperm.xlu0 %2608, %v2603
        %v2610 = vpop.permute.xlu0 %2609
        %2613 = vset.pattern.permute.xlu0 0
        %2614 = vperm.xlu0 %2613, %v2604
        %v2615 = vpop.permute.xlu0 %2614
        %2618 = vset.pattern.permute.xlu0 0
        %2619 = vperm.xlu0 %2618, %v2605
        %v2620 = vpop.permute.xlu0 %2619
        %2623 = vset.pattern.permute.xlu0 0
        %2624 = vperm.xlu0 %2623, %v2606
        %v2625 = vpop.permute.xlu0 %2624
        %v2627 = vmul.f32 %v2567, %v2610
        %v2628 = vmul.f32 %v2568, %v2615
        %v2629 = vmul.f32 %v2569, %v2620
        %v2630 = vmul.f32 %v2570, %v2625
        %2632 = vset.pattern.permute.xlu0 0
        %2633 = vperm.xlu0 %2632, %v2543
        %v2634 = vpop.permute.xlu0 %2633
        %2637 = vset.pattern.permute.xlu0 0
        %2638 = vperm.xlu0 %2637, %v2544
        %v2639 = vpop.permute.xlu0 %2638
        %2642 = vset.pattern.permute.xlu0 0
        %2643 = vperm.xlu0 %2642, %v2545
        %v2644 = vpop.permute.xlu0 %2643
        %2647 = vset.pattern.permute.xlu0 0
        %2648 = vperm.xlu0 %2647, %v2546
        %v2649 = vpop.permute.xlu0 %2648
        %v2651 = vadd.f32 %v2627, %v2634
        %v2652 = vadd.f32 %v2628, %v2639
        %v2653 = vadd.f32 %v2629, %v2644
        %v2654 = vadd.f32 %v2630, %v2649
        %2655 = vst.msk [vmem:[%s298 + $0x130] sm:$0xff] %vm1354, %v2651
        %2656 = vst.msk [vmem:[%s298 + $0x138] sm:$0xff] %vm1354, %v2652
        %2657 = vst.msk [vmem:[%s298 + $0x140] sm:$0xff] %vm1354, %v2653
        %2658 = vst.msk [vmem:[%s298 + $0x148] sm:$0xff] %vm1354, %v2654
      $region44: #{avgpool_cat_batchnorm.1} parent=39 // pred_fallthru
        _
      %s2659 = smul.u32 42, %s16
      %p2660 = scmp.lt.s32.totalorder %s2659, 83
      %s2661 = scalar_select %p2660, %s2659, 83
      %s2662 = smul.addr %s2661, 8
      %s2663 = scalar_lea.vmem %s5, %s2662
      // Predicated region
      $region45: #{avgpool_cat_batchnorm.1} parent=39 // pred_check
        %p2664 = pneg %p154
      $region46: #{avgpool_cat_batchnorm.1} parent=39 // pred_check_branch
        %2666 = sbr.rel (%p2664) target = $region48
      $region47: #{avgpool_cat_batchnorm.1} parent=39 // pred_region
        %s2667 = smul.u32 42, %s16
      $region48: #{avgpool_cat_batchnorm.1} parent=39 // pred_fallthru
        _
    $region40: #{avgpool_cat_batchnorm.1} parent=5 // pred_fallthru
      _
    %p2668 = scmp.le.s32.totalorder 2, %s11
    // Predicated region
    $region49: #{avgpool_cat_batchnorm.1} parent=5 // pred_check
      %p2669 = pneg %p2668
    $region50: #{avgpool_cat_batchnorm.1} parent=5 // pred_check_branch
      %2671 = sbr.rel (%p2669) target = $region52
    $region51: #{avgpool_cat_batchnorm.1} parent=5 // pred_region
      %s2672 = ssub.s32 %s11, 2
      // Predicated region
      $region53: #{avgpool_cat_batchnorm.1} parent=51 // pred_check
        %p2673 = pneg %p160
      $region54: #{avgpool_cat_batchnorm.1} parent=51 // pred_check_branch
        %2675 = sbr.rel (%p2673) target = $region56
      $region55: #{avgpool_cat_batchnorm.1} parent=51 // pred_region
        %s2676 = smul.u32 42, %s17
        %p2677 = scmp.lt.s32.totalorder %s2676, 83
        %s2678 = scalar_select %p2677, %s2676, 83
        %s2679 = smul.addr %s2678, 8
        %s2680 = scalar_lea.vmem %s5, %s2679
      $region56: #{avgpool_cat_batchnorm.1} parent=51 // pred_fallthru
        _
    $region52: #{avgpool_cat_batchnorm.1} parent=5 // pred_fallthru
      _
  $region6: #{avgpool_cat_batchnorm.1} parent=0 // loop_footer
    %s15 = sadd.s32 1, %s11
  $region7: #{avgpool_cat_batchnorm.1} parent=0 // loop_footer_branch
    %10 = sbr.rel target = $region3
  $region8: #{avgpool_cat_batchnorm.1} parent=0 // loop_exit
    _

</llo_original>
